<compile_context>
chip_gen: v7x
topology: tpu7x:2x2x1
jax: 0.10.0
libtpu: 0.0.40
codegen_flags: <defaults>
</compile_context>

<pallas_src>
import functools

import jax
import jax.numpy as jnp
from jax.experimental import pallas as pl
from jax.experimental.pallas import tpu as pltpu


def _round_up(x, m):
    return (x + m - 1) // m * m


def _repconv3x3_kernel(x_ref, w_ref, b_ref, o_ref, *, tap_offsets, marg):
    """Fused 3x3 conv + bias + SiLU on one image.

    x_ref : (C_in,  Lx) flattened padded image (lane = padded pixel idx + marg)
    w_ref : (9, C_out, C_in)  one (C_out, C_in) matrix per 3x3 tap
    b_ref : (C_out, 1)        fused bias (f32)
    o_ref : (C_out, Lo)       output, lane = padded pixel index
    """
    c_out, lo = o_ref.shape
    acc = jnp.zeros((c_out, lo), jnp.float32)
    for t, d in enumerate(tap_offsets):          # 9 static taps, fully unrolled
        start = marg + d                         # python int -> static slice
        xs = x_ref[:, start:start + lo]          # (C_in, Lo) shifted lane window
        acc = acc + jnp.dot(w_ref[t], xs, preferred_element_type=jnp.float32)
    acc = acc + b_ref[...]                       # (C_out, 1) broadcast over lanes
    acc = acc * jax.nn.sigmoid(acc)              # SiLU in f32 (EUP sigmoid)
    o_ref[...] = acc.astype(o_ref.dtype)


def repconv_forward(x, w_fused, b_fused, *, compute_dtype=jnp.float32):
    """RepConv eval forward: SiLU(conv3x3(x, w_fused) + b_fused), NCHW in/out."""
    n, c_in, h, w = x.shape
    c_out = w_fused.shape[0]
    hp, wp = h + 2, w + 2                        # spatially padded extents
    n_img = hp * wp                              # flattened padded pixels/image
    marg = wp + 1                                # max |tap shift| in flat index
    lo = _round_up(n_img, 128)                   # lane-dense output width
    lx = _round_up(lo + 2 * marg, 128)           # input width incl. shift margin

    # Glue: zero-pad conv halo, flatten pixels onto the lane dim, add margin.
    xp = jnp.pad(x, ((0, 0), (0, 0), (1, 1), (1, 1)))
    xf = xp.reshape(n, c_in, n_img)
    xf = jnp.pad(xf, ((0, 0), (0, 0), (marg, lx - marg - n_img)))
    xf = xf.astype(compute_dtype)

    # Weights per tap: (3,3,C_out,C_in) -> (9, C_out, C_in); bias as (C_out, 1).
    taps = jnp.transpose(w_fused, (2, 3, 0, 1)).reshape(9, c_out, c_in)
    taps = taps.astype(compute_dtype)
    bias = b_fused.reshape(c_out, 1).astype(jnp.float32)
    tap_offsets = tuple((ky - 1) * wp + (kx - 1)
                        for ky in range(3) for kx in range(3))

    kernel = functools.partial(_repconv3x3_kernel,
                               tap_offsets=tap_offsets, marg=marg)
    out = pl.pallas_call(
        kernel,
        out_shape=jax.ShapeDtypeStruct((n, c_out, lo), jnp.float32),
        grid_spec=pltpu.PrefetchScalarGridSpec(
            num_scalar_prefetch=0,
            grid=(n,),                                        # one block / image
            in_specs=[
                pl.BlockSpec((None, c_in, lx), lambda b: (b, 0, 0)),   # x slab
                pl.BlockSpec((9, c_out, c_in), lambda b: (0, 0, 0)),   # taps
                pl.BlockSpec((c_out, 1), lambda b: (0, 0)),            # bias
            ],
            out_specs=pl.BlockSpec((None, c_out, lo), lambda b: (b, 0, 0)),
        ),
        compiler_params=pltpu.CompilerParams(
            dimension_semantics=("parallel",)),               # both TCs on v7x
    )(xf, taps, bias)

    # Glue back to NCHW: drop lane padding + the garbage conv border.
    out = out[:, :, :n_img].reshape(n, c_out, hp, wp)[:, :, 1:-1, 1:-1]
    return out


def fuse_repconv_params(params, eps=1e-5):
    """Fold the three RepConv branches (eval-mode BN) into one 3x3 conv + bias."""
    c2, c1 = params['w3'].shape[:2]

    def _fold(bn):
        gamma, beta, mean, var = bn
        s = gamma / jnp.sqrt(var + eps)
        return s, beta - mean * s

    s3, b3 = _fold(params['bn3'])
    w_f = params['w3'] * s3[:, None, None, None]
    b_f = b3

    s1, b1 = _fold(params['bn1'])
    w1_as_3x3 = jnp.zeros((c2, c1, 3, 3), jnp.float32)
    w1_as_3x3 = w1_as_3x3.at[:, :, 1, 1].set(params['w1'][:, :, 0, 0] * s1[:, None])
    w_f = w_f + w1_as_3x3
    b_f = b_f + b1

    if params.get('bn_id') is not None:          # only exists when c1 == c2, s == 1
        si, bi = _fold(params['bn_id'])
        w_id = jnp.zeros((c2, c1, 3, 3), jnp.float32)
        w_id = w_id.at[jnp.arange(c2), jnp.arange(c1), 1, 1].set(si)
        w_f = w_f + w_id
        b_f = b_f + bi
    return w_f, b_f


# ----------------------------- pure-JAX reference -----------------------------

def _bn_eval(x, bn, eps):
    gamma, beta, mean, var = bn
    inv = gamma / jnp.sqrt(var + eps)
    return x * inv.reshape(1, -1, 1, 1) + (beta - mean * inv).reshape(1, -1, 1, 1)


def _conv_nchw(x, w, pad):
    return jax.lax.conv_general_dilated(
        x, w, window_strides=(1, 1), padding=((pad, pad), (pad, pad)),
        dimension_numbers=("NCHW", "OIHW", "NCHW"),
        precision=jax.lax.Precision.HIGHEST)


def repconv_reference(x, params, eps=1e-5):
    """Mirrors the PyTorch RepConv eval forward (unfused three-branch form)."""
    out = _bn_eval(_conv_nchw(x, params['w3'], 1), params['bn3'], eps)
    out = out + _bn_eval(_conv_nchw(x, params['w1'], 0), params['bn1'], eps)
    if params.get('bn_id') is not None:
        out = out + _bn_eval(x, params['bn_id'], eps)
    return out * jax.nn.sigmoid(out)             # SiLU


# ------------------------------------ test ------------------------------------

if __name__ == "__main__":
    key = jax.random.PRNGKey(0)
    eps = 1e-5

    def make_params(k, c1, c2, with_identity):
        ks = jax.random.split(k, 14)

        def bn(k0, k1, k2, k3, c):
            return (1.0 + 0.1 * jax.random.normal(k0, (c,), jnp.float32),   # gamma
                    0.1 * jax.random.normal(k1, (c,), jnp.float32),         # beta
                    0.1 * jax.random.normal(k2, (c,), jnp.float32),         # mean
                    0.5 + jax.random.uniform(k3, (c,), jnp.float32))        # var

        return {
            'w3': 0.1 * jax.random.normal(ks[0], (c2, c1, 3, 3), jnp.float32),
            'bn3': bn(ks[1], ks[2], ks[3], ks[4], c2),
            'w1': 0.1 * jax.random.normal(ks[5], (c2, c1, 1, 1), jnp.float32),
            'bn1': bn(ks[6], ks[7], ks[8], ks[9], c2),
            'bn_id': bn(ks[10], ks[11], ks[12], ks[13], c1) if with_identity else None,
        }

    # (batch, c1, c2, H, W); identity branch active iff c1 == c2 (stride 1).
    configs = [
        (2, 8, 8, 16, 16),    # with rbr_identity
        (2, 4, 8, 16, 16),    # without rbr_identity (c1 != c2)
    ]

    fwd_f32 = jax.jit(repconv_forward)
    fwd_bf16 = jax.jit(functools.partial(repconv_forward,
                                         compute_dtype=jnp.bfloat16))

    for idx, (bsz, c1, c2, h, w) in enumerate(configs):
        key, kx, kp = jax.random.split(key, 3)
        x = jax.random.normal(kx, (bsz, c1, h, w), jnp.float32)
        params = make_params(kp, c1, c2, with_identity=(c1 == c2))
        w_fused, b_fused = fuse_repconv_params(params, eps=eps)

        out = jax.block_until_ready(fwd_f32(x, w_fused, b_fused))
        ref = repconv_reference(x, params, eps=eps)
        assert out.shape == (bsz, c2, h, w)
        assert jnp.allclose(out, ref, rtol=2e-3, atol=2e-3), f"config {idx}: f32 mismatch"

        # bf16 matmul operands / f32 accumulation (perf-review item); activation
        # and bias stay f32, so only matmul rounding differs from the reference.
        out_bf16 = jax.block_until_ready(fwd_bf16(x, w_fused, b_fused))
        assert jnp.allclose(out_bf16, ref, rtol=5e-2, atol=5e-2), \
            f"config {idx}: bf16 mismatch"

    print("KERNEL_OK")
</pallas_src>

<mosaic_0001>
module attributes {stable_mosaic.version = 11 : i64} {
  func.func @_repconv3x3_kernel(%arg0: i32, %arg1: memref<1x8x512xf32, #tpu.memory_space<vmem>>, %arg2: memref<9x8x8xf32, #tpu.memory_space<vmem>>, %arg3: memref<8x1xf32, #tpu.memory_space<vmem>>, %arg4: memref<1x8x384xf32, #tpu.memory_space<vmem>>) attributes {dimension_semantics = [#tpu.dimension_semantics<parallel>], iteration_bounds = array<i64: 2>, scalar_prefetch = 0 : i64, scratch_operands = 0 : i64, tpu.core_type = #tpu.core_type<tc>, window_params = [{transform_indices = @transform_0, window_bounds = array<i64: 1, 8, 512>}, {pipeline_mode = #tpu.pipeline_mode<synchronous>, transform_indices = @transform_1, window_bounds = array<i64: 9, 8, 8>}, {pipeline_mode = #tpu.pipeline_mode<synchronous>, transform_indices = @transform_2, window_bounds = array<i64: 8, 1>}, {transform_indices = @transform_3, window_bounds = array<i64: 1, 8, 384>}]} {
    %cst = arith.constant 0.000000e+00 : f32
    %0 = vector.broadcast %cst : f32 to vector<8x384xf32>
    %c0 = arith.constant 0 : index
    %c0_0 = arith.constant 0 : index
    %c0_1 = arith.constant 0 : index
    %1 = vector.load %arg1[%c0, %c0_0, %c0_1] : memref<1x8x512xf32, #tpu.memory_space<vmem>>, vector<1x8x384xf32>
    %2 = vector.shape_cast %1 : vector<1x8x384xf32> to vector<8x384xf32>
    %c0_2 = arith.constant 0 : index
    %c0_3 = arith.constant 0 : index
    %c0_4 = arith.constant 0 : index
    %3 = vector.load %arg2[%c0_2, %c0_3, %c0_4] : memref<9x8x8xf32, #tpu.memory_space<vmem>>, vector<1x8x8xf32>
    %4 = vector.shape_cast %3 : vector<1x8x8xf32> to vector<8x8xf32>
    %cst_5 = arith.constant dense<0.000000e+00> : vector<8x384xf32>
    %5 = tpu.matmul %4, %2, %cst_5 {dimension_numbers = #tpu.dot_dimension_numbers<[1], [0], [0], [1], [0, 0, 1, 1], [], []>} : vector<8x8xf32>, vector<8x384xf32>, vector<8x384xf32> -> vector<8x384xf32>
    %6 = arith.addf %0, %5 : vector<8x384xf32>
    %c0_6 = arith.constant 0 : index
    %c0_7 = arith.constant 0 : index
    %c1 = arith.constant 1 : index
    %7 = vector.load %arg1[%c0_6, %c0_7, %c1] : memref<1x8x512xf32, #tpu.memory_space<vmem>>, vector<1x8x384xf32>
    %8 = vector.shape_cast %7 : vector<1x8x384xf32> to vector<8x384xf32>
    %c1_8 = arith.constant 1 : index
    %c0_9 = arith.constant 0 : index
    %c0_10 = arith.constant 0 : index
    %9 = vector.load %arg2[%c1_8, %c0_9, %c0_10] : memref<9x8x8xf32, #tpu.memory_space<vmem>>, vector<1x8x8xf32>
    %10 = vector.shape_cast %9 : vector<1x8x8xf32> to vector<8x8xf32>
    %cst_11 = arith.constant dense<0.000000e+00> : vector<8x384xf32>
    %11 = tpu.matmul %10, %8, %cst_11 {dimension_numbers = #tpu.dot_dimension_numbers<[1], [0], [0], [1], [0, 0, 1, 1], [], []>} : vector<8x8xf32>, vector<8x384xf32>, vector<8x384xf32> -> vector<8x384xf32>
    %12 = arith.addf %6, %11 : vector<8x384xf32>
    %c0_12 = arith.constant 0 : index
    %c0_13 = arith.constant 0 : index
    %c2 = arith.constant 2 : index
    %13 = vector.load %arg1[%c0_12, %c0_13, %c2] : memref<1x8x512xf32, #tpu.memory_space<vmem>>, vector<1x8x384xf32>
    %14 = vector.shape_cast %13 : vector<1x8x384xf32> to vector<8x384xf32>
    %c2_14 = arith.constant 2 : index
    %c0_15 = arith.constant 0 : index
    %c0_16 = arith.constant 0 : index
    %15 = vector.load %arg2[%c2_14, %c0_15, %c0_16] : memref<9x8x8xf32, #tpu.memory_space<vmem>>, vector<1x8x8xf32>
    %16 = vector.shape_cast %15 : vector<1x8x8xf32> to vector<8x8xf32>
    %cst_17 = arith.constant dense<0.000000e+00> : vector<8x384xf32>
    %17 = tpu.matmul %16, %14, %cst_17 {dimension_numbers = #tpu.dot_dimension_numbers<[1], [0], [0], [1], [0, 0, 1, 1], [], []>} : vector<8x8xf32>, vector<8x384xf32>, vector<8x384xf32> -> vector<8x384xf32>
    %18 = arith.addf %12, %17 : vector<8x384xf32>
    %c0_18 = arith.constant 0 : index
    %c0_19 = arith.constant 0 : index
    %c18 = arith.constant 18 : index
    %19 = vector.load %arg1[%c0_18, %c0_19, %c18] : memref<1x8x512xf32, #tpu.memory_space<vmem>>, vector<1x8x384xf32>
    %20 = vector.shape_cast %19 : vector<1x8x384xf32> to vector<8x384xf32>
    %c3 = arith.constant 3 : index
    %c0_20 = arith.constant 0 : index
    %c0_21 = arith.constant 0 : index
    %21 = vector.load %arg2[%c3, %c0_20, %c0_21] : memref<9x8x8xf32, #tpu.memory_space<vmem>>, vector<1x8x8xf32>
    %22 = vector.shape_cast %21 : vector<1x8x8xf32> to vector<8x8xf32>
    %cst_22 = arith.constant dense<0.000000e+00> : vector<8x384xf32>
    %23 = tpu.matmul %22, %20, %cst_22 {dimension_numbers = #tpu.dot_dimension_numbers<[1], [0], [0], [1], [0, 0, 1, 1], [], []>} : vector<8x8xf32>, vector<8x384xf32>, vector<8x384xf32> -> vector<8x384xf32>
    %24 = arith.addf %18, %23 : vector<8x384xf32>
    %c0_23 = arith.constant 0 : index
    %c0_24 = arith.constant 0 : index
    %c19 = arith.constant 19 : index
    %25 = vector.load %arg1[%c0_23, %c0_24, %c19] : memref<1x8x512xf32, #tpu.memory_space<vmem>>, vector<1x8x384xf32>
    %26 = vector.shape_cast %25 : vector<1x8x384xf32> to vector<8x384xf32>
    %c4 = arith.constant 4 : index
    %c0_25 = arith.constant 0 : index
    %c0_26 = arith.constant 0 : index
    %27 = vector.load %arg2[%c4, %c0_25, %c0_26] : memref<9x8x8xf32, #tpu.memory_space<vmem>>, vector<1x8x8xf32>
    %28 = vector.shape_cast %27 : vector<1x8x8xf32> to vector<8x8xf32>
    %cst_27 = arith.constant dense<0.000000e+00> : vector<8x384xf32>
    %29 = tpu.matmul %28, %26, %cst_27 {dimension_numbers = #tpu.dot_dimension_numbers<[1], [0], [0], [1], [0, 0, 1, 1], [], []>} : vector<8x8xf32>, vector<8x384xf32>, vector<8x384xf32> -> vector<8x384xf32>
    %30 = arith.addf %24, %29 : vector<8x384xf32>
    %c0_28 = arith.constant 0 : index
    %c0_29 = arith.constant 0 : index
    %c20 = arith.constant 20 : index
    %31 = vector.load %arg1[%c0_28, %c0_29, %c20] : memref<1x8x512xf32, #tpu.memory_space<vmem>>, vector<1x8x384xf32>
    %32 = vector.shape_cast %31 : vector<1x8x384xf32> to vector<8x384xf32>
    %c5 = arith.constant 5 : index
    %c0_30 = arith.constant 0 : index
    %c0_31 = arith.constant 0 : index
    %33 = vector.load %arg2[%c5, %c0_30, %c0_31] : memref<9x8x8xf32, #tpu.memory_space<vmem>>, vector<1x8x8xf32>
    %34 = vector.shape_cast %33 : vector<1x8x8xf32> to vector<8x8xf32>
    %cst_32 = arith.constant dense<0.000000e+00> : vector<8x384xf32>
    %35 = tpu.matmul %34, %32, %cst_32 {dimension_numbers = #tpu.dot_dimension_numbers<[1], [0], [0], [1], [0, 0, 1, 1], [], []>} : vector<8x8xf32>, vector<8x384xf32>, vector<8x384xf32> -> vector<8x384xf32>
    %36 = arith.addf %30, %35 : vector<8x384xf32>
    %c0_33 = arith.constant 0 : index
    %c0_34 = arith.constant 0 : index
    %c36 = arith.constant 36 : index
    %37 = vector.load %arg1[%c0_33, %c0_34, %c36] : memref<1x8x512xf32, #tpu.memory_space<vmem>>, vector<1x8x384xf32>
    %38 = vector.shape_cast %37 : vector<1x8x384xf32> to vector<8x384xf32>
    %c6 = arith.constant 6 : index
    %c0_35 = arith.constant 0 : index
    %c0_36 = arith.constant 0 : index
    %39 = vector.load %arg2[%c6, %c0_35, %c0_36] : memref<9x8x8xf32, #tpu.memory_space<vmem>>, vector<1x8x8xf32>
    %40 = vector.shape_cast %39 : vector<1x8x8xf32> to vector<8x8xf32>
    %cst_37 = arith.constant dense<0.000000e+00> : vector<8x384xf32>
    %41 = tpu.matmul %40, %38, %cst_37 {dimension_numbers = #tpu.dot_dimension_numbers<[1], [0], [0], [1], [0, 0, 1, 1], [], []>} : vector<8x8xf32>, vector<8x384xf32>, vector<8x384xf32> -> vector<8x384xf32>
    %42 = arith.addf %36, %41 : vector<8x384xf32>
    %c0_38 = arith.constant 0 : index
    %c0_39 = arith.constant 0 : index
    %c37 = arith.constant 37 : index
    %43 = vector.load %arg1[%c0_38, %c0_39, %c37] : memref<1x8x512xf32, #tpu.memory_space<vmem>>, vector<1x8x384xf32>
    %44 = vector.shape_cast %43 : vector<1x8x384xf32> to vector<8x384xf32>
    %c7 = arith.constant 7 : index
    %c0_40 = arith.constant 0 : index
    %c0_41 = arith.constant 0 : index
    %45 = vector.load %arg2[%c7, %c0_40, %c0_41] : memref<9x8x8xf32, #tpu.memory_space<vmem>>, vector<1x8x8xf32>
    %46 = vector.shape_cast %45 : vector<1x8x8xf32> to vector<8x8xf32>
    %cst_42 = arith.constant dense<0.000000e+00> : vector<8x384xf32>
    %47 = tpu.matmul %46, %44, %cst_42 {dimension_numbers = #tpu.dot_dimension_numbers<[1], [0], [0], [1], [0, 0, 1, 1], [], []>} : vector<8x8xf32>, vector<8x384xf32>, vector<8x384xf32> -> vector<8x384xf32>
    %48 = arith.addf %42, %47 : vector<8x384xf32>
    %c0_43 = arith.constant 0 : index
    %c0_44 = arith.constant 0 : index
    %c38 = arith.constant 38 : index
    %49 = vector.load %arg1[%c0_43, %c0_44, %c38] : memref<1x8x512xf32, #tpu.memory_space<vmem>>, vector<1x8x384xf32>
    %50 = vector.shape_cast %49 : vector<1x8x384xf32> to vector<8x384xf32>
    %c8 = arith.constant 8 : index
    %c0_45 = arith.constant 0 : index
    %c0_46 = arith.constant 0 : index
    %51 = vector.load %arg2[%c8, %c0_45, %c0_46] : memref<9x8x8xf32, #tpu.memory_space<vmem>>, vector<1x8x8xf32>
    %52 = vector.shape_cast %51 : vector<1x8x8xf32> to vector<8x8xf32>
    %cst_47 = arith.constant dense<0.000000e+00> : vector<8x384xf32>
    %53 = tpu.matmul %52, %50, %cst_47 {dimension_numbers = #tpu.dot_dimension_numbers<[1], [0], [0], [1], [0, 0, 1, 1], [], []>} : vector<8x8xf32>, vector<8x384xf32>, vector<8x384xf32> -> vector<8x384xf32>
    %54 = arith.addf %48, %53 : vector<8x384xf32>
    %c0_48 = arith.constant 0 : index
    %c0_49 = arith.constant 0 : index
    %55 = vector.load %arg3[%c0_48, %c0_49] : memref<8x1xf32, #tpu.memory_space<vmem>>, vector<8x1xf32>
    %56 = vector.broadcast %55 : vector<8x1xf32> to vector<8x384xf32>
    %57 = arith.addf %54, %56 : vector<8x384xf32>
    %58 = arith.negf %57 : vector<8x384xf32>
    %59 = math.exp %58 : vector<8x384xf32>
    %cst_50 = arith.constant 1.000000e+00 : f32
    %60 = vector.broadcast %cst_50 : f32 to vector<8x384xf32>
    %61 = arith.addf %60, %59 : vector<8x384xf32>
    %62 = arith.divf %60, %61 : vector<8x384xf32>
    %63 = arith.mulf %57, %62 : vector<8x384xf32>
    %c0_51 = arith.constant 0 : index
    %c0_52 = arith.constant 0 : index
    %c0_53 = arith.constant 0 : index
    %64 = vector.load %arg4[%c0_51, %c0_52, %c0_53] : memref<1x8x384xf32, #tpu.memory_space<vmem>>, vector<1x8x384xf32>
    %65 = vector.shape_cast %64 : vector<1x8x384xf32> to vector<8x384xf32>
    %66 = vector.shape_cast %63 : vector<8x384xf32> to vector<1x8x384xf32>
    tpu.vector_store %arg4[%c0_51, %c0_52, %c0_53], %66 {strides = array<i32>} : memref<1x8x384xf32, #tpu.memory_space<vmem>>, vector<1x8x384xf32>,
    return
  }
  func.func @transform_0(%arg0: i32) -> (i32, i32, i32) {
    %c0_i32 = arith.constant 0 : i32
    %c0_i32_0 = arith.constant 0 : i32
    %c0_i32_1 = arith.constant 0 : i32
    return %arg0, %c0_i32, %c0_i32_0 : i32, i32, i32
  }
  func.func @transform_1(%arg0: i32) -> (i32, i32, i32) {
    %c0_i32 = arith.constant 0 : i32
    %c0_i32_0 = arith.constant 0 : i32
    %c0_i32_1 = arith.constant 0 : i32
    %c0_i32_2 = arith.constant 0 : i32
    return %c0_i32, %c0_i32_0, %c0_i32_1 : i32, i32, i32
  }
  func.func @transform_2(%arg0: i32) -> (i32, i32) {
    %c0_i32 = arith.constant 0 : i32
    %c0_i32_0 = arith.constant 0 : i32
    %c0_i32_1 = arith.constant 0 : i32
    return %c0_i32, %c0_i32_0 : i32, i32
  }
  func.func @transform_3(%arg0: i32) -> (i32, i32, i32) {
    %c0_i32 = arith.constant 0 : i32
    %c0_i32_0 = arith.constant 0 : i32
    %c0_i32_1 = arith.constant 0 : i32
    return %arg0, %c0_i32, %c0_i32_0 : i32, i32, i32
  }
}

</mosaic_0001>

<llo_original>
// kernel: repconv_forward.1
$region0: #{repconv_forward.1}
  #allocation0 [shape = 'u32[]', space=smem, size = 0x4, offset = 0x4, fixed_abs, tag = 'smem constant byte address 0x4 - core index']
  #allocation1 [shape = 'u32[144,128]{1,0:T(1,128)}', space=vmem, size = 0x12000, scoped, tag = 'internal scratch']
  %s0 = inlined_call_operand.vmem [shape: f32[2,8,512], index: 0, kind: input, shape index: {}]
  %s1 = inlined_call_operand.vmem [shape: f32[9,8,8], index: 1, kind: input, shape index: {}]
  %s2 = inlined_call_operand.vmem [shape: f32[8,1], index: 2, kind: input, shape index: {}]
  %s3 = inlined_call_operand.vmem [shape: f32[2,8,384], index: 3, kind: output, shape index: {}]
  %s4 = sld [smem:[#allocation0]]
  $region45: #{repconv_forward.1} parent=0
    _
  %s6 = ssub.s32 1, %s4
  %s7 = scalar_select 0, %s6, %s4
  loop: start=0, step=1, limit=4
  $region2: #{repconv_forward.1} parent=0 // loop_pre_header
    _
  $region3: #{repconv_forward.1} parent=0 // loop_header
    %s9 = sphi 0, %s13
    %p10 = scmp.ge.s32.totalorder %s9, 4
    %s19 = sphi 0, %s21
    %s22 = sphi 0, %s19
    %s23 = sphi 0, %s22
    %s39 = sphi 0, %s23
    %s43 = sphi 0, %s43
    %s45 = sphi 0, %s43
    %s46 = sphi 0, %s45
    %s60 = sphi 0, %s46
    %s64 = sphi 0, %s64
    %s66 = sphi 0, %s64
    %s67 = sphi 0, %s66
    %s81 = sphi 0, %s67
    %s87 = sphi 0, %s89
    %s90 = sphi 0, %s87
    %s91 = sphi 0, %s90
    %s107 = sphi 0, %s91
  $region4: #{repconv_forward.1} parent=0 // loop_header_branch
    %12 = sbr.rel (%p10) target = $region8
  $region5: #{repconv_forward.1} parent=0 // loop_body
    %s14 = ssub.s32 %s9, 1
    %s15 = ssub.s32 %s9, 2
    %s16 = sadd.s32 %s9, 1
    %s17 = ssub.s32 %s9, %s16
    %p18 = scmp.eq.s32.totalorder %s17, 0
    %s20 = sadd.s32 %s19, 1
    %s21 = scalar_select %p18, %s19, %s20
    %p24 = pneg %p18
    %p25 = scmp.eq.s32.totalorder %s9, 1
    %p26 = por %p24, %p25
    %p27 = scmp.ne.s32.totalorder %s19, %s22
    %p28 = scmp.eq.s32.totalorder %s9, 0
    %p29 = por %p27, %p28
    %p30 = scmp.ne.s32.totalorder %s19, %s22
    %p31 = scmp.eq.s32.totalorder %s14, 1
    %p32 = por %p30, %p31
    %p33 = scmp.ne.s32.totalorder %s22, %s23
    %p34 = scmp.eq.s32.totalorder %s14, 0
    %p35 = por %p33, %p34
    %p36 = scmp.ne.s32.totalorder %s22, %s23
    %p37 = scmp.eq.s32.totalorder %s15, 1
    %p38 = por %p36, %p37
    %p40 = scmp.ne.s32.totalorder %s23, %s39
    %p41 = scmp.eq.s32.totalorder %s15, 0
    %p42 = por %p40, %p41
    %s44 = sadd.s32 %s43, 1
    %p47 = scmp.eq.s32.totalorder %s9, 1
    %p48 = scmp.ne.s32.totalorder %s43, %s45
    %p49 = scmp.eq.s32.totalorder %s9, 0
    %p50 = por %p48, %p49
    %p51 = scmp.ne.s32.totalorder %s43, %s45
    %p52 = scmp.eq.s32.totalorder %s14, 1
    %p53 = por %p51, %p52
    %p54 = scmp.ne.s32.totalorder %s45, %s46
    %p55 = scmp.eq.s32.totalorder %s14, 0
    %p56 = por %p54, %p55
    %p57 = scmp.ne.s32.totalorder %s45, %s46
    %p58 = scmp.eq.s32.totalorder %s15, 1
    %p59 = por %p57, %p58
    %p61 = scmp.ne.s32.totalorder %s46, %s60
    %p62 = scmp.eq.s32.totalorder %s15, 0
    %p63 = por %p61, %p62
    %s65 = sadd.s32 %s64, 1
    %p68 = scmp.eq.s32.totalorder %s9, 1
    %p69 = scmp.ne.s32.totalorder %s64, %s66
    %p70 = scmp.eq.s32.totalorder %s9, 0
    %p71 = por %p69, %p70
    %p72 = scmp.ne.s32.totalorder %s64, %s66
    %p73 = scmp.eq.s32.totalorder %s14, 1
    %p74 = por %p72, %p73
    %p75 = scmp.ne.s32.totalorder %s66, %s67
    %p76 = scmp.eq.s32.totalorder %s14, 0
    %p77 = por %p75, %p76
    %p78 = scmp.ne.s32.totalorder %s66, %s67
    %p79 = scmp.eq.s32.totalorder %s15, 1
    %p80 = por %p78, %p79
    %p82 = scmp.ne.s32.totalorder %s67, %s81
    %p83 = scmp.eq.s32.totalorder %s15, 0
    %p84 = por %p82, %p83
    %s85 = ssub.s32 %s9, %s16
    %p86 = scmp.eq.s32.totalorder %s85, 0
    %s88 = sadd.s32 %s87, 1
    %s89 = scalar_select %p86, %s87, %s88
    %p92 = pneg %p86
    %p93 = scmp.eq.s32.totalorder %s9, 1
    %p94 = por %p92, %p93
    %p95 = scmp.ne.s32.totalorder %s87, %s90
    %p96 = scmp.eq.s32.totalorder %s9, 0
    %p97 = por %p95, %p96
    %p98 = scmp.ne.s32.totalorder %s87, %s90
    %p99 = scmp.eq.s32.totalorder %s14, 1
    %p100 = por %p98, %p99
    %p101 = scmp.ne.s32.totalorder %s90, %s91
    %p102 = scmp.eq.s32.totalorder %s14, 0
    %p103 = por %p101, %p102
    %p104 = scmp.ne.s32.totalorder %s90, %s91
    %p105 = scmp.eq.s32.totalorder %s15, 1
    %p106 = por %p104, %p105
    %p108 = scmp.ne.s32.totalorder %s91, %s107
    %p109 = scmp.eq.s32.totalorder %s15, 0
    %p110 = por %p108, %p109
    %p111 = scmp.le.s32.totalorder 1, %s9
    %p112 = scmp.lt.s32.totalorder %s9, 3
    %p113 = pnand %p111, %p112
    %p114 = pneg %p113
    // Predicated region
    $region9: #{repconv_forward.1} parent=5 // pred_check
      _
    $region10: #{repconv_forward.1} parent=5 // pred_check_branch
      %116 = sbr.rel (%p113) target = $region12
    $region11: #{repconv_forward.1} parent=5 // pred_region
      %s117 = ssub.s32 %s9, 1
      // Predicated region
      $region13: #{repconv_forward.1} parent=11 // pred_check
        %p118 = pneg %p56
      $region14: #{repconv_forward.1} parent=11 // pred_check_branch
        %120 = sbr.rel (%p118) target = $region16
      $region15: #{repconv_forward.1} parent=11 // pred_region
        _
      $region16: #{repconv_forward.1} parent=11 // pred_fallthru
        _
      // Predicated region
      $region17: #{repconv_forward.1} parent=11 // pred_check
        %p121 = pneg %p77
      $region18: #{repconv_forward.1} parent=11 // pred_check_branch
        %123 = sbr.rel (%p121) target = $region20
      $region19: #{repconv_forward.1} parent=11 // pred_region
        _
      $region20: #{repconv_forward.1} parent=11 // pred_fallthru
        _
    $region12: #{repconv_forward.1} parent=5 // pred_fallthru
      _
    %p124 = scmp.lt.s32.totalorder %s9, 2
    // Predicated region
    $region21: #{repconv_forward.1} parent=5 // pred_check
      %p125 = pneg %p124
    $region22: #{repconv_forward.1} parent=5 // pred_check_branch
      %127 = sbr.rel (%p125) target = $region24
    $region23: #{repconv_forward.1} parent=5 // pred_region
      // Predicated region
      $region25: #{repconv_forward.1} parent=23 // pred_check
        %p128 = pneg %p29
      $region26: #{repconv_forward.1} parent=23 // pred_check_branch
        %130 = sbr.rel (%p128) target = $region28
      $region27: #{repconv_forward.1} parent=23 // pred_region
        %p131 = scmp.lt.s32.totalorder %s9, 1
        %s132 = scalar_select %p131, %s9, 1
        %s133 = smul.addr %s132, 4
        %s134 = smul.addr %s133, 8
        %s135 = scalar_lea.vmem %s0, %s134
      $region28: #{repconv_forward.1} parent=23 // pred_fallthru
        _
    $region24: #{repconv_forward.1} parent=5 // pred_fallthru
      _
    %p136 = scmp.le.s32.totalorder 1, %s9
    %p137 = scmp.lt.s32.totalorder %s9, 3
    %p138 = pnand %p136, %p137
    %p139 = pneg %p138
    // Predicated region
    $region29: #{repconv_forward.1} parent=5 // pred_check
      _
    $region30: #{repconv_forward.1} parent=5 // pred_check_branch
      %141 = sbr.rel (%p138) target = $region32
    $region31: #{repconv_forward.1} parent=5 // pred_region
      %s142 = ssub.s32 %s9, 1
      %p143 = scmp.lt.s32.totalorder %s14, 1
      %s144 = scalar_select %p143, %s14, 1
      %s145 = smul.addr %s144, 4
      %s146 = smul.addr %s145, 8
      %s147 = scalar_lea.vmem %s0, %s146
      %p148 = pneg %p35
      %p149 = pneg %p32
      %p150 = pneg %p56
      %p151 = pneg %p53
      %p152 = pneg %p77
      %p153 = pneg %p74
      %p154 = pneg %p103
      %p155 = pneg %p100
      %p156 = scmp.lt.s32.totalorder %s14, 1
      %s157 = scalar_select %p156, %s14, 1
      %s158 = smul.addr %s157, 3
      %s159 = smul.addr %s158, 8
      %s160 = scalar_lea.vmem %s3, %s159
      %p161 = scmp.lt.s32.totalorder %s14, 1
      %s162 = scalar_select %p161, %s14, 1
      %s163 = smul.addr %s162, 4
      %s164 = smul.addr %s163, 8
      %s165 = scalar_lea.vmem %s0, %s164
      %p166 = scmp.lt.s32.totalorder %s14, 1
      %s167 = scalar_select %p166, %s14, 1
      %s168 = smul.addr %s167, 3
      %s169 = smul.addr %s168, 8
      %s170 = scalar_lea.vmem %s3, %s169
      %v171 = vld [vmem:[%s165] sm:$0xff]
      %v172 = vld [vmem:[%s165 + $0x8] sm:$0xff]
      %v173 = vld [vmem:[%s165 + $0x10] sm:$0xff]
      %v174 = vld [vmem:[%s1] sm:$0xff]
      %v175 = vld [vmem:[%s165] sm:$0xff]
      %v176 = vld [vmem:[%s165 + $0x8] sm:$0xff]
      %v177 = vld [vmem:[%s165 + $0x10] sm:$0xff]
      %v178 = vld [vmem:[%s165 + $0x18] sm:$0xff]
      %s179 = scalar_lea.vmem %s1, 8
      %v180 = vld [vmem:[%s179] sm:$0xff]
      %185 = vrot.lane.b32.xlu0 %v175, 127
      %v186 = vpop.permute.xlu0 %185
      %187 = vrot.lane.b32.xlu0 %v176, 127
      %v188 = vpop.permute.xlu0 %187
      %189 = vrot.lane.b32.xlu0 %v177, 127
      %v190 = vpop.permute.xlu0 %189
      %191 = vrot.lane.b32.xlu0 %v178, 127
      %v192 = vpop.permute.xlu0 %191
      %vm193 = vcmask 1039360
      %v194 = vsel %vm193, %v186, %v188
      %v195 = vsel %vm193, %v188, %v190
      %v196 = vsel %vm193, %v190, %v192
      %vm200 = vcmask 64512
      %v202 = vsel %vm200, %v180, 0
      %204 = vmatprep.subr.mxu0 %v195
      %205 = vmatpush1.msra.mxu0 %v194
      %206 = vmatprep.subr.mxu0 0.0
      %207 = vmatpush1.msra.mxu0 0.0
      %208 = vmatprep.subr.mxu0 0.0
      %209 = vmatpush1.msra.mxu0 0.0
      %210 = vmatprep.subr.mxu0 0.0
      %211 = vmatpush1.msra.mxu0 0.0
      %212 = vmatprep.subr.mxu0 0.0
      %213 = vmatpush1.msra.mxu0 0.0
      %214 = vmatprep.subr.mxu0 0.0
      %215 = vmatpush1.msra.mxu0 0.0
      %216 = vmatprep.subr.mxu0 0.0
      %217 = vmatpush1.msra.mxu0 0.0
      %218 = vmatprep.subr.mxu0 0.0
      %219 = vmatpush1.msra.mxu0 0.0
      %220 = vmatprep.subr.mxu0 0.0
      %221 = vmatpush1.msra.mxu0 0.0
      %222 = vmatprep.subr.mxu0 0.0
      %223 = vmatpush1.msra.mxu0 0.0
      %224 = vmatprep.subr.mxu0 0.0
      %225 = vmatpush1.msra.mxu0 0.0
      %226 = vmatprep.subr.mxu0 0.0
      %227 = vmatpush1.msra.mxu0 0.0
      %228 = vmatprep.subr.mxu0 0.0
      %229 = vmatpush1.msra.mxu0 0.0
      %230 = vmatprep.subr.mxu0 0.0
      %231 = vmatpush1.msra.mxu0 0.0
      %232 = vmatprep.subr.mxu0 0.0
      %233 = vmatpush1.msra.mxu0 0.0
      %234 = vmatprep.subr.mxu0 0.0
      %235 = vmatpush1.msra.mxu0 0.0
      %236 = vmatprep.subr.mxu0 0.0
      %237 = vmatpush1.msra.mxu0 0.0
      %238 = vmatprep.subr.mxu0 0.0
      %239 = vmatpush1.msra.mxu0 0.0
      %240 = vmatprep.subr.mxu0 0.0
      %241 = vmatpush1.msra.mxu0 0.0
      %242 = vmatprep.subr.mxu0 0.0
      %243 = vmatpush1.msra.mxu0 0.0
      %244 = vmatprep.subr.mxu0 0.0
      %245 = vmatpush1.msra.mxu0 0.0
      %246 = vmatprep.subr.mxu0 0.0
      %247 = vmatpush1.msra.mxu0 0.0
      %248 = vmatprep.subr.mxu0 0.0
      %249 = vmatpush1.msra.mxu0 0.0
      %250 = vmatprep.subr.mxu0 0.0
      %251 = vmatpush1.msra.mxu0 0.0
      %252 = vmatprep.subr.mxu0 0.0
      %253 = vmatpush1.msra.mxu0 0.0
      %254 = vmatprep.subr.mxu0 0.0
      %255 = vmatpush1.msra.mxu0 0.0
      %256 = vmatprep.subr.mxu0 0.0
      %257 = vmatpush1.msra.mxu0 0.0
      %258 = vmatprep.subr.mxu0 0.0
      %259 = vmatpush1.msra.mxu0 0.0
      %260 = vmatprep.subr.mxu0 0.0
      %261 = vmatpush1.msra.mxu0 0.0
      %262 = vmatprep.subr.mxu0 0.0
      %263 = vmatpush1.msra.mxu0 0.0
      %264 = vmatprep.subr.mxu0 0.0
      %265 = vmatpush1.msra.mxu0 0.0
      %266 = vmatprep.subr.mxu0 0.0
      %267 = vmatpush1.msra.mxu0 0.0
      %268 = vmatprep.mubr.f32.mxu0 0.0
      %269 = vmatmul.mubr.f32.gmra.mrb[0].mxu0 %v202
      %v270 = vpop.f32.mrb[0].mxu0
      %v271 = vadd.f32 0.0, %v270
      %v272 = vpop.f32.mrb[0].mxu0
      %v273 = vadd.f32 0.0, %v272
      %274 = vdwg.mxu0
      %275 = vmatprep.subr.mxu0 0.0
      %276 = vmatpush1.msra.mxu0 %v196
      %277 = vmatprep.subr.mxu0 0.0
      %278 = vmatpush1.msra.mxu0 0.0
      %279 = vmatprep.subr.mxu0 0.0
      %280 = vmatpush1.msra.mxu0 0.0
      %281 = vmatprep.subr.mxu0 0.0
      %282 = vmatpush1.msra.mxu0 0.0
      %283 = vmatprep.subr.mxu0 0.0
      %284 = vmatpush1.msra.mxu0 0.0
      %285 = vmatprep.subr.mxu0 0.0
      %286 = vmatpush1.msra.mxu0 0.0
      %287 = vmatprep.subr.mxu0 0.0
      %288 = vmatpush1.msra.mxu0 0.0
      %289 = vmatprep.subr.mxu0 0.0
      %290 = vmatpush1.msra.mxu0 0.0
      %291 = vmatprep.subr.mxu0 0.0
      %292 = vmatpush1.msra.mxu0 0.0
      %293 = vmatprep.subr.mxu0 0.0
      %294 = vmatpush1.msra.mxu0 0.0
      %295 = vmatprep.subr.mxu0 0.0
      %296 = vmatpush1.msra.mxu0 0.0
      %297 = vmatprep.subr.mxu0 0.0
      %298 = vmatpush1.msra.mxu0 0.0
      %299 = vmatprep.subr.mxu0 0.0
      %300 = vmatpush1.msra.mxu0 0.0
      %301 = vmatprep.subr.mxu0 0.0
      %302 = vmatpush1.msra.mxu0 0.0
      %303 = vmatprep.subr.mxu0 0.0
      %304 = vmatpush1.msra.mxu0 0.0
      %305 = vmatprep.subr.mxu0 0.0
      %306 = vmatpush1.msra.mxu0 0.0
      %307 = vmatprep.subr.mxu0 0.0
      %308 = vmatpush1.msra.mxu0 0.0
      %309 = vmatprep.subr.mxu0 0.0
      %310 = vmatpush1.msra.mxu0 0.0
      %311 = vmatprep.subr.mxu0 0.0
      %312 = vmatpush1.msra.mxu0 0.0
      %313 = vmatprep.subr.mxu0 0.0
      %314 = vmatpush1.msra.mxu0 0.0
      %315 = vmatprep.subr.mxu0 0.0
      %316 = vmatpush1.msra.mxu0 0.0
      %317 = vmatprep.subr.mxu0 0.0
      %318 = vmatpush1.msra.mxu0 0.0
      %319 = vmatprep.subr.mxu0 0.0
      %320 = vmatpush1.msra.mxu0 0.0
      %321 = vmatprep.subr.mxu0 0.0
      %322 = vmatpush1.msra.mxu0 0.0
      %323 = vmatprep.subr.mxu0 0.0
      %324 = vmatpush1.msra.mxu0 0.0
      %325 = vmatprep.subr.mxu0 0.0
      %326 = vmatpush1.msra.mxu0 0.0
      %327 = vmatprep.subr.mxu0 0.0
      %328 = vmatpush1.msra.mxu0 0.0
      %329 = vmatprep.subr.mxu0 0.0
      %330 = vmatpush1.msra.mxu0 0.0
      %331 = vmatprep.subr.mxu0 0.0
      %332 = vmatpush1.msra.mxu0 0.0
      %333 = vmatprep.subr.mxu0 0.0
      %334 = vmatpush1.msra.mxu0 0.0
      %335 = vmatprep.subr.mxu0 0.0
      %336 = vmatpush1.msra.mxu0 0.0
      %337 = vmatprep.subr.mxu0 0.0
      %338 = vmatpush1.msra.mxu0 0.0
      %339 = vmatprep.mubr.f32.mxu0 0.0
      %340 = vmatmul.mubr.f32.gmra.mrb[0].mxu0 %v202
      %v341 = vpop.f32.mrb[0].mxu0
      %v342 = vadd.f32 0.0, %v341
      %v343 = vpop.f32.mrb[0].mxu0
      %344 = vdwg.mxu0
      %v346 = vsel %vm200, %v174, 0
      %348 = vmatprep.subr.mxu0 %v172
      %349 = vmatpush1.msra.mxu0 %v171
      %350 = vmatprep.subr.mxu0 0.0
      %351 = vmatpush1.msra.mxu0 0.0
      %352 = vmatprep.subr.mxu0 0.0
      %353 = vmatpush1.msra.mxu0 0.0
      %354 = vmatprep.subr.mxu0 0.0
      %355 = vmatpush1.msra.mxu0 0.0
      %356 = vmatprep.subr.mxu0 0.0
      %357 = vmatpush1.msra.mxu0 0.0
      %358 = vmatprep.subr.mxu0 0.0
      %359 = vmatpush1.msra.mxu0 0.0
      %360 = vmatprep.subr.mxu0 0.0
      %361 = vmatpush1.msra.mxu0 0.0
      %362 = vmatprep.subr.mxu0 0.0
      %363 = vmatpush1.msra.mxu0 0.0
      %364 = vmatprep.subr.mxu0 0.0
      %365 = vmatpush1.msra.mxu0 0.0
      %366 = vmatprep.subr.mxu0 0.0
      %367 = vmatpush1.msra.mxu0 0.0
      %368 = vmatprep.subr.mxu0 0.0
      %369 = vmatpush1.msra.mxu0 0.0
      %370 = vmatprep.subr.mxu0 0.0
      %371 = vmatpush1.msra.mxu0 0.0
      %372 = vmatprep.subr.mxu0 0.0
      %373 = vmatpush1.msra.mxu0 0.0
      %374 = vmatprep.subr.mxu0 0.0
      %375 = vmatpush1.msra.mxu0 0.0
      %376 = vmatprep.subr.mxu0 0.0
      %377 = vmatpush1.msra.mxu0 0.0
      %378 = vmatprep.subr.mxu0 0.0
      %379 = vmatpush1.msra.mxu0 0.0
      %380 = vmatprep.subr.mxu0 0.0
      %381 = vmatpush1.msra.mxu0 0.0
      %382 = vmatprep.subr.mxu0 0.0
      %383 = vmatpush1.msra.mxu0 0.0
      %384 = vmatprep.subr.mxu0 0.0
      %385 = vmatpush1.msra.mxu0 0.0
      %386 = vmatprep.subr.mxu0 0.0
      %387 = vmatpush1.msra.mxu0 0.0
      %388 = vmatprep.subr.mxu0 0.0
      %389 = vmatpush1.msra.mxu0 0.0
      %390 = vmatprep.subr.mxu0 0.0
      %391 = vmatpush1.msra.mxu0 0.0
      %392 = vmatprep.subr.mxu0 0.0
      %393 = vmatpush1.msra.mxu0 0.0
      %394 = vmatprep.subr.mxu0 0.0
      %395 = vmatpush1.msra.mxu0 0.0
      %396 = vmatprep.subr.mxu0 0.0
      %397 = vmatpush1.msra.mxu0 0.0
      %398 = vmatprep.subr.mxu0 0.0
      %399 = vmatpush1.msra.mxu0 0.0
      %400 = vmatprep.subr.mxu0 0.0
      %401 = vmatpush1.msra.mxu0 0.0
      %402 = vmatprep.subr.mxu0 0.0
      %403 = vmatpush1.msra.mxu0 0.0
      %404 = vmatprep.subr.mxu0 0.0
      %405 = vmatpush1.msra.mxu0 0.0
      %406 = vmatprep.subr.mxu0 0.0
      %407 = vmatpush1.msra.mxu0 0.0
      %408 = vmatprep.subr.mxu0 0.0
      %409 = vmatpush1.msra.mxu0 0.0
      %410 = vmatprep.subr.mxu0 0.0
      %411 = vmatpush1.msra.mxu0 0.0
      %412 = vmatprep.mubr.f32.mxu0 0.0
      %413 = vmatmul.mubr.f32.gmra.mrb[0].mxu0 %v346
      %v414 = vpop.f32.mrb[0].mxu0
      %v415 = vadd.f32 %v271, %v414
      %v416 = vpop.f32.mrb[0].mxu0
      %v417 = vadd.f32 %v273, %v416
      %418 = vdwg.mxu0
      %419 = vmatprep.subr.mxu0 0.0
      %420 = vmatpush1.msra.mxu0 %v173
      %421 = vmatprep.subr.mxu0 0.0
      %422 = vmatpush1.msra.mxu0 0.0
      %423 = vmatprep.subr.mxu0 0.0
      %424 = vmatpush1.msra.mxu0 0.0
      %425 = vmatprep.subr.mxu0 0.0
      %426 = vmatpush1.msra.mxu0 0.0
      %427 = vmatprep.subr.mxu0 0.0
      %428 = vmatpush1.msra.mxu0 0.0
      %429 = vmatprep.subr.mxu0 0.0
      %430 = vmatpush1.msra.mxu0 0.0
      %431 = vmatprep.subr.mxu0 0.0
      %432 = vmatpush1.msra.mxu0 0.0
      %433 = vmatprep.subr.mxu0 0.0
      %434 = vmatpush1.msra.mxu0 0.0
      %435 = vmatprep.subr.mxu0 0.0
      %436 = vmatpush1.msra.mxu0 0.0
      %437 = vmatprep.subr.mxu0 0.0
      %438 = vmatpush1.msra.mxu0 0.0
      %439 = vmatprep.subr.mxu0 0.0
      %440 = vmatpush1.msra.mxu0 0.0
      %441 = vmatprep.subr.mxu0 0.0
      %442 = vmatpush1.msra.mxu0 0.0
      %443 = vmatprep.subr.mxu0 0.0
      %444 = vmatpush1.msra.mxu0 0.0
      %445 = vmatprep.subr.mxu0 0.0
      %446 = vmatpush1.msra.mxu0 0.0
      %447 = vmatprep.subr.mxu0 0.0
      %448 = vmatpush1.msra.mxu0 0.0
      %449 = vmatprep.subr.mxu0 0.0
      %450 = vmatpush1.msra.mxu0 0.0
      %451 = vmatprep.subr.mxu0 0.0
      %452 = vmatpush1.msra.mxu0 0.0
      %453 = vmatprep.subr.mxu0 0.0
      %454 = vmatpush1.msra.mxu0 0.0
      %455 = vmatprep.subr.mxu0 0.0
      %456 = vmatpush1.msra.mxu0 0.0
      %457 = vmatprep.subr.mxu0 0.0
      %458 = vmatpush1.msra.mxu0 0.0
      %459 = vmatprep.subr.mxu0 0.0
      %460 = vmatpush1.msra.mxu0 0.0
      %461 = vmatprep.subr.mxu0 0.0
      %462 = vmatpush1.msra.mxu0 0.0
      %463 = vmatprep.subr.mxu0 0.0
      %464 = vmatpush1.msra.mxu0 0.0
      %465 = vmatprep.subr.mxu0 0.0
      %466 = vmatpush1.msra.mxu0 0.0
      %467 = vmatprep.subr.mxu0 0.0
      %468 = vmatpush1.msra.mxu0 0.0
      %469 = vmatprep.subr.mxu0 0.0
      %470 = vmatpush1.msra.mxu0 0.0
      %471 = vmatprep.subr.mxu0 0.0
      %472 = vmatpush1.msra.mxu0 0.0
      %473 = vmatprep.subr.mxu0 0.0
      %474 = vmatpush1.msra.mxu0 0.0
      %475 = vmatprep.subr.mxu0 0.0
      %476 = vmatpush1.msra.mxu0 0.0
      %477 = vmatprep.subr.mxu0 0.0
      %478 = vmatpush1.msra.mxu0 0.0
      %479 = vmatprep.subr.mxu0 0.0
      %480 = vmatpush1.msra.mxu0 0.0
      %481 = vmatprep.subr.mxu0 0.0
      %482 = vmatpush1.msra.mxu0 0.0
      %483 = vmatprep.mubr.f32.mxu0 0.0
      %484 = vmatmul.mubr.f32.gmra.mrb[0].mxu0 %v346
      %v485 = vpop.f32.mrb[0].mxu0
      %v486 = vadd.f32 %v342, %v485
      %v487 = vpop.f32.mrb[0].mxu0
      %488 = vdwg.mxu0
      %s489 = scalar_lea.vmem %s1, 16
      %v490 = vld [vmem:[%s489] sm:$0xff]
      %491 = vrot.lane.b32.xlu0 %v175, 126
      %v492 = vpop.permute.xlu0 %491
      %493 = vrot.lane.b32.xlu0 %v176, 126
      %v494 = vpop.permute.xlu0 %493
      %495 = vrot.lane.b32.xlu0 %v177, 126
      %v496 = vpop.permute.xlu0 %495
      %497 = vrot.lane.b32.xlu0 %v178, 126
      %v498 = vpop.permute.xlu0 %497
      %vm499 = vcmask 1031168
      %v500 = vsel %vm499, %v492, %v494
      %v501 = vsel %vm499, %v494, %v496
      %v502 = vsel %vm499, %v496, %v498
      %v507 = vsel %vm200, %v490, 0
      %509 = vmatprep.subr.mxu0 %v501
      %510 = vmatpush1.msra.mxu0 %v500
      %511 = vmatprep.subr.mxu0 0.0
      %512 = vmatpush1.msra.mxu0 0.0
      %513 = vmatprep.subr.mxu0 0.0
      %514 = vmatpush1.msra.mxu0 0.0
      %515 = vmatprep.subr.mxu0 0.0
      %516 = vmatpush1.msra.mxu0 0.0
      %517 = vmatprep.subr.mxu0 0.0
      %518 = vmatpush1.msra.mxu0 0.0
      %519 = vmatprep.subr.mxu0 0.0
      %520 = vmatpush1.msra.mxu0 0.0
      %521 = vmatprep.subr.mxu0 0.0
      %522 = vmatpush1.msra.mxu0 0.0
      %523 = vmatprep.subr.mxu0 0.0
      %524 = vmatpush1.msra.mxu0 0.0
      %525 = vmatprep.subr.mxu0 0.0
      %526 = vmatpush1.msra.mxu0 0.0
      %527 = vmatprep.subr.mxu0 0.0
      %528 = vmatpush1.msra.mxu0 0.0
      %529 = vmatprep.subr.mxu0 0.0
      %530 = vmatpush1.msra.mxu0 0.0
      %531 = vmatprep.subr.mxu0 0.0
      %532 = vmatpush1.msra.mxu0 0.0
      %533 = vmatprep.subr.mxu0 0.0
      %534 = vmatpush1.msra.mxu0 0.0
      %535 = vmatprep.subr.mxu0 0.0
      %536 = vmatpush1.msra.mxu0 0.0
      %537 = vmatprep.subr.mxu0 0.0
      %538 = vmatpush1.msra.mxu0 0.0
      %539 = vmatprep.subr.mxu0 0.0
      %540 = vmatpush1.msra.mxu0 0.0
      %541 = vmatprep.subr.mxu0 0.0
      %542 = vmatpush1.msra.mxu0 0.0
      %543 = vmatprep.subr.mxu0 0.0
      %544 = vmatpush1.msra.mxu0 0.0
      %545 = vmatprep.subr.mxu0 0.0
      %546 = vmatpush1.msra.mxu0 0.0
      %547 = vmatprep.subr.mxu0 0.0
      %548 = vmatpush1.msra.mxu0 0.0
      %549 = vmatprep.subr.mxu0 0.0
      %550 = vmatpush1.msra.mxu0 0.0
      %551 = vmatprep.subr.mxu0 0.0
      %552 = vmatpush1.msra.mxu0 0.0
      %553 = vmatprep.subr.mxu0 0.0
      %554 = vmatpush1.msra.mxu0 0.0
      %555 = vmatprep.subr.mxu0 0.0
      %556 = vmatpush1.msra.mxu0 0.0
      %557 = vmatprep.subr.mxu0 0.0
      %558 = vmatpush1.msra.mxu0 0.0
      %559 = vmatprep.subr.mxu0 0.0
      %560 = vmatpush1.msra.mxu0 0.0
      %561 = vmatprep.subr.mxu0 0.0
      %562 = vmatpush1.msra.mxu0 0.0
      %563 = vmatprep.subr.mxu0 0.0
      %564 = vmatpush1.msra.mxu0 0.0
      %565 = vmatprep.subr.mxu0 0.0
      %566 = vmatpush1.msra.mxu0 0.0
      %567 = vmatprep.subr.mxu0 0.0
      %568 = vmatpush1.msra.mxu0 0.0
      %569 = vmatprep.subr.mxu0 0.0
      %570 = vmatpush1.msra.mxu0 0.0
      %571 = vmatprep.subr.mxu0 0.0
      %572 = vmatpush1.msra.mxu0 0.0
      %573 = vmatprep.mubr.f32.mxu0 0.0
      %574 = vmatmul.mubr.f32.gmra.mrb[0].mxu0 %v507
      %v575 = vpop.f32.mrb[0].mxu0
      %v576 = vadd.f32 0.0, %v575
      %v577 = vpop.f32.mrb[0].mxu0
      %v578 = vadd.f32 0.0, %v577
      %579 = vdwg.mxu0
      %580 = vmatprep.subr.mxu0 0.0
      %581 = vmatpush1.msra.mxu0 %v502
      %582 = vmatprep.subr.mxu0 0.0
      %583 = vmatpush1.msra.mxu0 0.0
      %584 = vmatprep.subr.mxu0 0.0
      %585 = vmatpush1.msra.mxu0 0.0
      %586 = vmatprep.subr.mxu0 0.0
      %587 = vmatpush1.msra.mxu0 0.0
      %588 = vmatprep.subr.mxu0 0.0
      %589 = vmatpush1.msra.mxu0 0.0
      %590 = vmatprep.subr.mxu0 0.0
      %591 = vmatpush1.msra.mxu0 0.0
      %592 = vmatprep.subr.mxu0 0.0
      %593 = vmatpush1.msra.mxu0 0.0
      %594 = vmatprep.subr.mxu0 0.0
      %595 = vmatpush1.msra.mxu0 0.0
      %596 = vmatprep.subr.mxu0 0.0
      %597 = vmatpush1.msra.mxu0 0.0
      %598 = vmatprep.subr.mxu0 0.0
      %599 = vmatpush1.msra.mxu0 0.0
      %600 = vmatprep.subr.mxu0 0.0
      %601 = vmatpush1.msra.mxu0 0.0
      %602 = vmatprep.subr.mxu0 0.0
      %603 = vmatpush1.msra.mxu0 0.0
      %604 = vmatprep.subr.mxu0 0.0
      %605 = vmatpush1.msra.mxu0 0.0
      %606 = vmatprep.subr.mxu0 0.0
      %607 = vmatpush1.msra.mxu0 0.0
      %608 = vmatprep.subr.mxu0 0.0
      %609 = vmatpush1.msra.mxu0 0.0
      %610 = vmatprep.subr.mxu0 0.0
      %611 = vmatpush1.msra.mxu0 0.0
      %612 = vmatprep.subr.mxu0 0.0
      %613 = vmatpush1.msra.mxu0 0.0
      %614 = vmatprep.subr.mxu0 0.0
      %615 = vmatpush1.msra.mxu0 0.0
      %616 = vmatprep.subr.mxu0 0.0
      %617 = vmatpush1.msra.mxu0 0.0
      %618 = vmatprep.subr.mxu0 0.0
      %619 = vmatpush1.msra.mxu0 0.0
      %620 = vmatprep.subr.mxu0 0.0
      %621 = vmatpush1.msra.mxu0 0.0
      %622 = vmatprep.subr.mxu0 0.0
      %623 = vmatpush1.msra.mxu0 0.0
      %624 = vmatprep.subr.mxu0 0.0
      %625 = vmatpush1.msra.mxu0 0.0
      %626 = vmatprep.subr.mxu0 0.0
      %627 = vmatpush1.msra.mxu0 0.0
      %628 = vmatprep.subr.mxu0 0.0
      %629 = vmatpush1.msra.mxu0 0.0
      %630 = vmatprep.subr.mxu0 0.0
      %631 = vmatpush1.msra.mxu0 0.0
      %632 = vmatprep.subr.mxu0 0.0
      %633 = vmatpush1.msra.mxu0 0.0
      %634 = vmatprep.subr.mxu0 0.0
      %635 = vmatpush1.msra.mxu0 0.0
      %636 = vmatprep.subr.mxu0 0.0
      %637 = vmatpush1.msra.mxu0 0.0
      %638 = vmatprep.subr.mxu0 0.0
      %639 = vmatpush1.msra.mxu0 0.0
      %640 = vmatprep.subr.mxu0 0.0
      %641 = vmatpush1.msra.mxu0 0.0
      %642 = vmatprep.subr.mxu0 0.0
      %643 = vmatpush1.msra.mxu0 0.0
      %644 = vmatprep.mubr.f32.mxu0 0.0
      %645 = vmatmul.mubr.f32.gmra.mrb[0].mxu0 %v507
      %v646 = vpop.f32.mrb[0].mxu0
      %v647 = vadd.f32 0.0, %v646
      %v648 = vpop.f32.mrb[0].mxu0
      %649 = vdwg.mxu0
      %v650 = vadd.f32 %v415, %v576
      %v651 = vadd.f32 %v417, %v578
      %v652 = vadd.f32 %v486, %v647
      %s653 = scalar_lea.vmem %s1, 24
      %v654 = vld [vmem:[%s653] sm:$0xff]
      %655 = vrot.lane.b32.xlu0 %v175, 110
      %v656 = vpop.permute.xlu0 %655
      %657 = vrot.lane.b32.xlu0 %v176, 110
      %v658 = vpop.permute.xlu0 %657
      %659 = vrot.lane.b32.xlu0 %v177, 110
      %v660 = vpop.permute.xlu0 %659
      %661 = vrot.lane.b32.xlu0 %v178, 110
      %v662 = vpop.permute.xlu0 %661
      %vm663 = vcmask 900096
      %v664 = vsel %vm663, %v656, %v658
      %v665 = vsel %vm663, %v658, %v660
      %v666 = vsel %vm663, %v660, %v662
      %v671 = vsel %vm200, %v654, 0
      %673 = vmatprep.subr.mxu0 %v665
      %674 = vmatpush1.msra.mxu0 %v664
      %675 = vmatprep.subr.mxu0 0.0
      %676 = vmatpush1.msra.mxu0 0.0
      %677 = vmatprep.subr.mxu0 0.0
      %678 = vmatpush1.msra.mxu0 0.0
      %679 = vmatprep.subr.mxu0 0.0
      %680 = vmatpush1.msra.mxu0 0.0
      %681 = vmatprep.subr.mxu0 0.0
      %682 = vmatpush1.msra.mxu0 0.0
      %683 = vmatprep.subr.mxu0 0.0
      %684 = vmatpush1.msra.mxu0 0.0
      %685 = vmatprep.subr.mxu0 0.0
      %686 = vmatpush1.msra.mxu0 0.0
      %687 = vmatprep.subr.mxu0 0.0
      %688 = vmatpush1.msra.mxu0 0.0
      %689 = vmatprep.subr.mxu0 0.0
      %690 = vmatpush1.msra.mxu0 0.0
      %691 = vmatprep.subr.mxu0 0.0
      %692 = vmatpush1.msra.mxu0 0.0
      %693 = vmatprep.subr.mxu0 0.0
      %694 = vmatpush1.msra.mxu0 0.0
      %695 = vmatprep.subr.mxu0 0.0
      %696 = vmatpush1.msra.mxu0 0.0
      %697 = vmatprep.subr.mxu0 0.0
      %698 = vmatpush1.msra.mxu0 0.0
      %699 = vmatprep.subr.mxu0 0.0
      %700 = vmatpush1.msra.mxu0 0.0
      %701 = vmatprep.subr.mxu0 0.0
      %702 = vmatpush1.msra.mxu0 0.0
      %703 = vmatprep.subr.mxu0 0.0
      %704 = vmatpush1.msra.mxu0 0.0
      %705 = vmatprep.subr.mxu0 0.0
      %706 = vmatpush1.msra.mxu0 0.0
      %707 = vmatprep.subr.mxu0 0.0
      %708 = vmatpush1.msra.mxu0 0.0
      %709 = vmatprep.subr.mxu0 0.0
      %710 = vmatpush1.msra.mxu0 0.0
      %711 = vmatprep.subr.mxu0 0.0
      %712 = vmatpush1.msra.mxu0 0.0
      %713 = vmatprep.subr.mxu0 0.0
      %714 = vmatpush1.msra.mxu0 0.0
      %715 = vmatprep.subr.mxu0 0.0
      %716 = vmatpush1.msra.mxu0 0.0
      %717 = vmatprep.subr.mxu0 0.0
      %718 = vmatpush1.msra.mxu0 0.0
      %719 = vmatprep.subr.mxu0 0.0
      %720 = vmatpush1.msra.mxu0 0.0
      %721 = vmatprep.subr.mxu0 0.0
      %722 = vmatpush1.msra.mxu0 0.0
      %723 = vmatprep.subr.mxu0 0.0
      %724 = vmatpush1.msra.mxu0 0.0
      %725 = vmatprep.subr.mxu0 0.0
      %726 = vmatpush1.msra.mxu0 0.0
      %727 = vmatprep.subr.mxu0 0.0
      %728 = vmatpush1.msra.mxu0 0.0
      %729 = vmatprep.subr.mxu0 0.0
      %730 = vmatpush1.msra.mxu0 0.0
      %731 = vmatprep.subr.mxu0 0.0
      %732 = vmatpush1.msra.mxu0 0.0
      %733 = vmatprep.subr.mxu0 0.0
      %734 = vmatpush1.msra.mxu0 0.0
      %735 = vmatprep.subr.mxu0 0.0
      %736 = vmatpush1.msra.mxu0 0.0
      %737 = vmatprep.mubr.f32.mxu0 0.0
      %738 = vmatmul.mubr.f32.gmra.mrb[0].mxu0 %v671
      %v739 = vpop.f32.mrb[0].mxu0
      %v740 = vadd.f32 0.0, %v739
      %v741 = vpop.f32.mrb[0].mxu0
      %v742 = vadd.f32 0.0, %v741
      %743 = vdwg.mxu0
      %744 = vmatprep.subr.mxu0 0.0
      %745 = vmatpush1.msra.mxu0 %v666
      %746 = vmatprep.subr.mxu0 0.0
      %747 = vmatpush1.msra.mxu0 0.0
      %748 = vmatprep.subr.mxu0 0.0
      %749 = vmatpush1.msra.mxu0 0.0
      %750 = vmatprep.subr.mxu0 0.0
      %751 = vmatpush1.msra.mxu0 0.0
      %752 = vmatprep.subr.mxu0 0.0
      %753 = vmatpush1.msra.mxu0 0.0
      %754 = vmatprep.subr.mxu0 0.0
      %755 = vmatpush1.msra.mxu0 0.0
      %756 = vmatprep.subr.mxu0 0.0
      %757 = vmatpush1.msra.mxu0 0.0
      %758 = vmatprep.subr.mxu0 0.0
      %759 = vmatpush1.msra.mxu0 0.0
      %760 = vmatprep.subr.mxu0 0.0
      %761 = vmatpush1.msra.mxu0 0.0
      %762 = vmatprep.subr.mxu0 0.0
      %763 = vmatpush1.msra.mxu0 0.0
      %764 = vmatprep.subr.mxu0 0.0
      %765 = vmatpush1.msra.mxu0 0.0
      %766 = vmatprep.subr.mxu0 0.0
      %767 = vmatpush1.msra.mxu0 0.0
      %768 = vmatprep.subr.mxu0 0.0
      %769 = vmatpush1.msra.mxu0 0.0
      %770 = vmatprep.subr.mxu0 0.0
      %771 = vmatpush1.msra.mxu0 0.0
      %772 = vmatprep.subr.mxu0 0.0
      %773 = vmatpush1.msra.mxu0 0.0
      %774 = vmatprep.subr.mxu0 0.0
      %775 = vmatpush1.msra.mxu0 0.0
      %776 = vmatprep.subr.mxu0 0.0
      %777 = vmatpush1.msra.mxu0 0.0
      %778 = vmatprep.subr.mxu0 0.0
      %779 = vmatpush1.msra.mxu0 0.0
      %780 = vmatprep.subr.mxu0 0.0
      %781 = vmatpush1.msra.mxu0 0.0
      %782 = vmatprep.subr.mxu0 0.0
      %783 = vmatpush1.msra.mxu0 0.0
      %784 = vmatprep.subr.mxu0 0.0
      %785 = vmatpush1.msra.mxu0 0.0
      %786 = vmatprep.subr.mxu0 0.0
      %787 = vmatpush1.msra.mxu0 0.0
      %788 = vmatprep.subr.mxu0 0.0
      %789 = vmatpush1.msra.mxu0 0.0
      %790 = vmatprep.subr.mxu0 0.0
      %791 = vmatpush1.msra.mxu0 0.0
      %792 = vmatprep.subr.mxu0 0.0
      %793 = vmatpush1.msra.mxu0 0.0
      %794 = vmatprep.subr.mxu0 0.0
      %795 = vmatpush1.msra.mxu0 0.0
      %796 = vmatprep.subr.mxu0 0.0
      %797 = vmatpush1.msra.mxu0 0.0
      %798 = vmatprep.subr.mxu0 0.0
      %799 = vmatpush1.msra.mxu0 0.0
      %800 = vmatprep.subr.mxu0 0.0
      %801 = vmatpush1.msra.mxu0 0.0
      %802 = vmatprep.subr.mxu0 0.0
      %803 = vmatpush1.msra.mxu0 0.0
      %804 = vmatprep.subr.mxu0 0.0
      %805 = vmatpush1.msra.mxu0 0.0
      %806 = vmatprep.subr.mxu0 0.0
      %807 = vmatpush1.msra.mxu0 0.0
      %808 = vmatprep.mubr.f32.mxu0 0.0
      %809 = vmatmul.mubr.f32.gmra.mrb[0].mxu0 %v671
      %v810 = vpop.f32.mrb[0].mxu0
      %v811 = vadd.f32 0.0, %v810
      %v812 = vpop.f32.mrb[0].mxu0
      %813 = vdwg.mxu0
      %v814 = vadd.f32 %v650, %v740
      %v815 = vadd.f32 %v651, %v742
      %v816 = vadd.f32 %v652, %v811
      %s817 = scalar_lea.vmem %s1, 32
      %v818 = vld [vmem:[%s817] sm:$0xff]
      %819 = vrot.lane.b32.xlu0 %v175, 109
      %v820 = vpop.permute.xlu0 %819
      %821 = vrot.lane.b32.xlu0 %v176, 109
      %v822 = vpop.permute.xlu0 %821
      %823 = vrot.lane.b32.xlu0 %v177, 109
      %v824 = vpop.permute.xlu0 %823
      %825 = vrot.lane.b32.xlu0 %v178, 109
      %v826 = vpop.permute.xlu0 %825
      %vm827 = vcmask 891904
      %v828 = vsel %vm827, %v820, %v822
      %v829 = vsel %vm827, %v822, %v824
      %v830 = vsel %vm827, %v824, %v826
      %v835 = vsel %vm200, %v818, 0
      %837 = vmatprep.subr.mxu0 %v829
      %838 = vmatpush1.msra.mxu0 %v828
      %839 = vmatprep.subr.mxu0 0.0
      %840 = vmatpush1.msra.mxu0 0.0
      %841 = vmatprep.subr.mxu0 0.0
      %842 = vmatpush1.msra.mxu0 0.0
      %843 = vmatprep.subr.mxu0 0.0
      %844 = vmatpush1.msra.mxu0 0.0
      %845 = vmatprep.subr.mxu0 0.0
      %846 = vmatpush1.msra.mxu0 0.0
      %847 = vmatprep.subr.mxu0 0.0
      %848 = vmatpush1.msra.mxu0 0.0
      %849 = vmatprep.subr.mxu0 0.0
      %850 = vmatpush1.msra.mxu0 0.0
      %851 = vmatprep.subr.mxu0 0.0
      %852 = vmatpush1.msra.mxu0 0.0
      %853 = vmatprep.subr.mxu0 0.0
      %854 = vmatpush1.msra.mxu0 0.0
      %855 = vmatprep.subr.mxu0 0.0
      %856 = vmatpush1.msra.mxu0 0.0
      %857 = vmatprep.subr.mxu0 0.0
      %858 = vmatpush1.msra.mxu0 0.0
      %859 = vmatprep.subr.mxu0 0.0
      %860 = vmatpush1.msra.mxu0 0.0
      %861 = vmatprep.subr.mxu0 0.0
      %862 = vmatpush1.msra.mxu0 0.0
      %863 = vmatprep.subr.mxu0 0.0
      %864 = vmatpush1.msra.mxu0 0.0
      %865 = vmatprep.subr.mxu0 0.0
      %866 = vmatpush1.msra.mxu0 0.0
      %867 = vmatprep.subr.mxu0 0.0
      %868 = vmatpush1.msra.mxu0 0.0
      %869 = vmatprep.subr.mxu0 0.0
      %870 = vmatpush1.msra.mxu0 0.0
      %871 = vmatprep.subr.mxu0 0.0
      %872 = vmatpush1.msra.mxu0 0.0
      %873 = vmatprep.subr.mxu0 0.0
      %874 = vmatpush1.msra.mxu0 0.0
      %875 = vmatprep.subr.mxu0 0.0
      %876 = vmatpush1.msra.mxu0 0.0
      %877 = vmatprep.subr.mxu0 0.0
      %878 = vmatpush1.msra.mxu0 0.0
      %879 = vmatprep.subr.mxu0 0.0
      %880 = vmatpush1.msra.mxu0 0.0
      %881 = vmatprep.subr.mxu0 0.0
      %882 = vmatpush1.msra.mxu0 0.0
      %883 = vmatprep.subr.mxu0 0.0
      %884 = vmatpush1.msra.mxu0 0.0
      %885 = vmatprep.subr.mxu0 0.0
      %886 = vmatpush1.msra.mxu0 0.0
      %887 = vmatprep.subr.mxu0 0.0
      %888 = vmatpush1.msra.mxu0 0.0
      %889 = vmatprep.subr.mxu0 0.0
      %890 = vmatpush1.msra.mxu0 0.0
      %891 = vmatprep.subr.mxu0 0.0
      %892 = vmatpush1.msra.mxu0 0.0
      %893 = vmatprep.subr.mxu0 0.0
      %894 = vmatpush1.msra.mxu0 0.0
      %895 = vmatprep.subr.mxu0 0.0
      %896 = vmatpush1.msra.mxu0 0.0
      %897 = vmatprep.subr.mxu0 0.0
      %898 = vmatpush1.msra.mxu0 0.0
      %899 = vmatprep.subr.mxu0 0.0
      %900 = vmatpush1.msra.mxu0 0.0
      %901 = vmatprep.mubr.f32.mxu0 0.0
      %902 = vmatmul.mubr.f32.gmra.mrb[0].mxu0 %v835
      %v903 = vpop.f32.mrb[0].mxu0
      %v904 = vadd.f32 0.0, %v903
      %v905 = vpop.f32.mrb[0].mxu0
      %v906 = vadd.f32 0.0, %v905
      %907 = vdwg.mxu0
      %908 = vmatprep.subr.mxu0 0.0
      %909 = vmatpush1.msra.mxu0 %v830
      %910 = vmatprep.subr.mxu0 0.0
      %911 = vmatpush1.msra.mxu0 0.0
      %912 = vmatprep.subr.mxu0 0.0
      %913 = vmatpush1.msra.mxu0 0.0
      %914 = vmatprep.subr.mxu0 0.0
      %915 = vmatpush1.msra.mxu0 0.0
      %916 = vmatprep.subr.mxu0 0.0
      %917 = vmatpush1.msra.mxu0 0.0
      %918 = vmatprep.subr.mxu0 0.0
      %919 = vmatpush1.msra.mxu0 0.0
      %920 = vmatprep.subr.mxu0 0.0
      %921 = vmatpush1.msra.mxu0 0.0
      %922 = vmatprep.subr.mxu0 0.0
      %923 = vmatpush1.msra.mxu0 0.0
      %924 = vmatprep.subr.mxu0 0.0
      %925 = vmatpush1.msra.mxu0 0.0
      %926 = vmatprep.subr.mxu0 0.0
      %927 = vmatpush1.msra.mxu0 0.0
      %928 = vmatprep.subr.mxu0 0.0
      %929 = vmatpush1.msra.mxu0 0.0
      %930 = vmatprep.subr.mxu0 0.0
      %931 = vmatpush1.msra.mxu0 0.0
      %932 = vmatprep.subr.mxu0 0.0
      %933 = vmatpush1.msra.mxu0 0.0
      %934 = vmatprep.subr.mxu0 0.0
      %935 = vmatpush1.msra.mxu0 0.0
      %936 = vmatprep.subr.mxu0 0.0
      %937 = vmatpush1.msra.mxu0 0.0
      %938 = vmatprep.subr.mxu0 0.0
      %939 = vmatpush1.msra.mxu0 0.0
      %940 = vmatprep.subr.mxu0 0.0
      %941 = vmatpush1.msra.mxu0 0.0
      %942 = vmatprep.subr.mxu0 0.0
      %943 = vmatpush1.msra.mxu0 0.0
      %944 = vmatprep.subr.mxu0 0.0
      %945 = vmatpush1.msra.mxu0 0.0
      %946 = vmatprep.subr.mxu0 0.0
      %947 = vmatpush1.msra.mxu0 0.0
      %948 = vmatprep.subr.mxu0 0.0
      %949 = vmatpush1.msra.mxu0 0.0
      %950 = vmatprep.subr.mxu0 0.0
      %951 = vmatpush1.msra.mxu0 0.0
      %952 = vmatprep.subr.mxu0 0.0
      %953 = vmatpush1.msra.mxu0 0.0
      %954 = vmatprep.subr.mxu0 0.0
      %955 = vmatpush1.msra.mxu0 0.0
      %956 = vmatprep.subr.mxu0 0.0
      %957 = vmatpush1.msra.mxu0 0.0
      %958 = vmatprep.subr.mxu0 0.0
      %959 = vmatpush1.msra.mxu0 0.0
      %960 = vmatprep.subr.mxu0 0.0
      %961 = vmatpush1.msra.mxu0 0.0
      %962 = vmatprep.subr.mxu0 0.0
      %963 = vmatpush1.msra.mxu0 0.0
      %964 = vmatprep.subr.mxu0 0.0
      %965 = vmatpush1.msra.mxu0 0.0
      %966 = vmatprep.subr.mxu0 0.0
      %967 = vmatpush1.msra.mxu0 0.0
      %968 = vmatprep.subr.mxu0 0.0
      %969 = vmatpush1.msra.mxu0 0.0
      %970 = vmatprep.subr.mxu0 0.0
      %971 = vmatpush1.msra.mxu0 0.0
      %972 = vmatprep.mubr.f32.mxu0 0.0
      %973 = vmatmul.mubr.f32.gmra.mrb[0].mxu0 %v835
      %v974 = vpop.f32.mrb[0].mxu0
      %v975 = vadd.f32 0.0, %v974
      %v976 = vpop.f32.mrb[0].mxu0
      %977 = vdwg.mxu0
      %v978 = vadd.f32 %v814, %v904
      %v979 = vadd.f32 %v815, %v906
      %v980 = vadd.f32 %v816, %v975
      %s981 = scalar_lea.vmem %s1, 40
      %v982 = vld [vmem:[%s981] sm:$0xff]
      %983 = vrot.lane.b32.xlu0 %v175, 108
      %v984 = vpop.permute.xlu0 %983
      %985 = vrot.lane.b32.xlu0 %v176, 108
      %v986 = vpop.permute.xlu0 %985
      %987 = vrot.lane.b32.xlu0 %v177, 108
      %v988 = vpop.permute.xlu0 %987
      %989 = vrot.lane.b32.xlu0 %v178, 108
      %v990 = vpop.permute.xlu0 %989
      %vm991 = vcmask 883712
      %v992 = vsel %vm991, %v984, %v986
      %v993 = vsel %vm991, %v986, %v988
      %v994 = vsel %vm991, %v988, %v990
      %v999 = vsel %vm200, %v982, 0
      %1001 = vmatprep.subr.mxu0 %v993
      %1002 = vmatpush1.msra.mxu0 %v992
      %1003 = vmatprep.subr.mxu0 0.0
      %1004 = vmatpush1.msra.mxu0 0.0
      %1005 = vmatprep.subr.mxu0 0.0
      %1006 = vmatpush1.msra.mxu0 0.0
      %1007 = vmatprep.subr.mxu0 0.0
      %1008 = vmatpush1.msra.mxu0 0.0
      %1009 = vmatprep.subr.mxu0 0.0
      %1010 = vmatpush1.msra.mxu0 0.0
      %1011 = vmatprep.subr.mxu0 0.0
      %1012 = vmatpush1.msra.mxu0 0.0
      %1013 = vmatprep.subr.mxu0 0.0
      %1014 = vmatpush1.msra.mxu0 0.0
      %1015 = vmatprep.subr.mxu0 0.0
      %1016 = vmatpush1.msra.mxu0 0.0
      %1017 = vmatprep.subr.mxu0 0.0
      %1018 = vmatpush1.msra.mxu0 0.0
      %1019 = vmatprep.subr.mxu0 0.0
      %1020 = vmatpush1.msra.mxu0 0.0
      %1021 = vmatprep.subr.mxu0 0.0
      %1022 = vmatpush1.msra.mxu0 0.0
      %1023 = vmatprep.subr.mxu0 0.0
      %1024 = vmatpush1.msra.mxu0 0.0
      %1025 = vmatprep.subr.mxu0 0.0
      %1026 = vmatpush1.msra.mxu0 0.0
      %1027 = vmatprep.subr.mxu0 0.0
      %1028 = vmatpush1.msra.mxu0 0.0
      %1029 = vmatprep.subr.mxu0 0.0
      %1030 = vmatpush1.msra.mxu0 0.0
      %1031 = vmatprep.subr.mxu0 0.0
      %1032 = vmatpush1.msra.mxu0 0.0
      %1033 = vmatprep.subr.mxu0 0.0
      %1034 = vmatpush1.msra.mxu0 0.0
      %1035 = vmatprep.subr.mxu0 0.0
      %1036 = vmatpush1.msra.mxu0 0.0
      %1037 = vmatprep.subr.mxu0 0.0
      %1038 = vmatpush1.msra.mxu0 0.0
      %1039 = vmatprep.subr.mxu0 0.0
      %1040 = vmatpush1.msra.mxu0 0.0
      %1041 = vmatprep.subr.mxu0 0.0
      %1042 = vmatpush1.msra.mxu0 0.0
      %1043 = vmatprep.subr.mxu0 0.0
      %1044 = vmatpush1.msra.mxu0 0.0
      %1045 = vmatprep.subr.mxu0 0.0
      %1046 = vmatpush1.msra.mxu0 0.0
      %1047 = vmatprep.subr.mxu0 0.0
      %1048 = vmatpush1.msra.mxu0 0.0
      %1049 = vmatprep.subr.mxu0 0.0
      %1050 = vmatpush1.msra.mxu0 0.0
      %1051 = vmatprep.subr.mxu0 0.0
      %1052 = vmatpush1.msra.mxu0 0.0
      %1053 = vmatprep.subr.mxu0 0.0
      %1054 = vmatpush1.msra.mxu0 0.0
      %1055 = vmatprep.subr.mxu0 0.0
      %1056 = vmatpush1.msra.mxu0 0.0
      %1057 = vmatprep.subr.mxu0 0.0
      %1058 = vmatpush1.msra.mxu0 0.0
      %1059 = vmatprep.subr.mxu0 0.0
      %1060 = vmatpush1.msra.mxu0 0.0
      %1061 = vmatprep.subr.mxu0 0.0
      %1062 = vmatpush1.msra.mxu0 0.0
      %1063 = vmatprep.subr.mxu0 0.0
      %1064 = vmatpush1.msra.mxu0 0.0
      %1065 = vmatprep.mubr.f32.mxu0 0.0
      %1066 = vmatmul.mubr.f32.gmra.mrb[0].mxu0 %v999
      %v1067 = vpop.f32.mrb[0].mxu0
      %v1068 = vadd.f32 0.0, %v1067
      %v1069 = vpop.f32.mrb[0].mxu0
      %v1070 = vadd.f32 0.0, %v1069
      %1071 = vdwg.mxu0
      %1072 = vmatprep.subr.mxu0 0.0
      %1073 = vmatpush1.msra.mxu0 %v994
      %1074 = vmatprep.subr.mxu0 0.0
      %1075 = vmatpush1.msra.mxu0 0.0
      %1076 = vmatprep.subr.mxu0 0.0
      %1077 = vmatpush1.msra.mxu0 0.0
      %1078 = vmatprep.subr.mxu0 0.0
      %1079 = vmatpush1.msra.mxu0 0.0
      %1080 = vmatprep.subr.mxu0 0.0
      %1081 = vmatpush1.msra.mxu0 0.0
      %1082 = vmatprep.subr.mxu0 0.0
      %1083 = vmatpush1.msra.mxu0 0.0
      %1084 = vmatprep.subr.mxu0 0.0
      %1085 = vmatpush1.msra.mxu0 0.0
      %1086 = vmatprep.subr.mxu0 0.0
      %1087 = vmatpush1.msra.mxu0 0.0
      %1088 = vmatprep.subr.mxu0 0.0
      %1089 = vmatpush1.msra.mxu0 0.0
      %1090 = vmatprep.subr.mxu0 0.0
      %1091 = vmatpush1.msra.mxu0 0.0
      %1092 = vmatprep.subr.mxu0 0.0
      %1093 = vmatpush1.msra.mxu0 0.0
      %1094 = vmatprep.subr.mxu0 0.0
      %1095 = vmatpush1.msra.mxu0 0.0
      %1096 = vmatprep.subr.mxu0 0.0
      %1097 = vmatpush1.msra.mxu0 0.0
      %1098 = vmatprep.subr.mxu0 0.0
      %1099 = vmatpush1.msra.mxu0 0.0
      %1100 = vmatprep.subr.mxu0 0.0
      %1101 = vmatpush1.msra.mxu0 0.0
      %1102 = vmatprep.subr.mxu0 0.0
      %1103 = vmatpush1.msra.mxu0 0.0
      %1104 = vmatprep.subr.mxu0 0.0
      %1105 = vmatpush1.msra.mxu0 0.0
      %1106 = vmatprep.subr.mxu0 0.0
      %1107 = vmatpush1.msra.mxu0 0.0
      %1108 = vmatprep.subr.mxu0 0.0
      %1109 = vmatpush1.msra.mxu0 0.0
      %1110 = vmatprep.subr.mxu0 0.0
      %1111 = vmatpush1.msra.mxu0 0.0
      %1112 = vmatprep.subr.mxu0 0.0
      %1113 = vmatpush1.msra.mxu0 0.0
      %1114 = vmatprep.subr.mxu0 0.0
      %1115 = vmatpush1.msra.mxu0 0.0
      %1116 = vmatprep.subr.mxu0 0.0
      %1117 = vmatpush1.msra.mxu0 0.0
      %1118 = vmatprep.subr.mxu0 0.0
      %1119 = vmatpush1.msra.mxu0 0.0
      %1120 = vmatprep.subr.mxu0 0.0
      %1121 = vmatpush1.msra.mxu0 0.0
      %1122 = vmatprep.subr.mxu0 0.0
      %1123 = vmatpush1.msra.mxu0 0.0
      %1124 = vmatprep.subr.mxu0 0.0
      %1125 = vmatpush1.msra.mxu0 0.0
      %1126 = vmatprep.subr.mxu0 0.0
      %1127 = vmatpush1.msra.mxu0 0.0
      %1128 = vmatprep.subr.mxu0 0.0
      %1129 = vmatpush1.msra.mxu0 0.0
      %1130 = vmatprep.subr.mxu0 0.0
      %1131 = vmatpush1.msra.mxu0 0.0
      %1132 = vmatprep.subr.mxu0 0.0
      %1133 = vmatpush1.msra.mxu0 0.0
      %1134 = vmatprep.subr.mxu0 0.0
      %1135 = vmatpush1.msra.mxu0 0.0
      %1136 = vmatprep.mubr.f32.mxu0 0.0
      %1137 = vmatmul.mubr.f32.gmra.mrb[0].mxu0 %v999
      %v1138 = vpop.f32.mrb[0].mxu0
      %v1139 = vadd.f32 0.0, %v1138
      %v1140 = vpop.f32.mrb[0].mxu0
      %1141 = vdwg.mxu0
      %v1142 = vadd.f32 %v978, %v1068
      %v1143 = vadd.f32 %v979, %v1070
      %v1144 = vadd.f32 %v980, %v1139
      %s1145 = scalar_lea.vmem %s1, 48
      %v1146 = vld [vmem:[%s1145] sm:$0xff]
      %1147 = vrot.lane.b32.xlu0 %v175, 92
      %v1148 = vpop.permute.xlu0 %1147
      %1149 = vrot.lane.b32.xlu0 %v176, 92
      %v1150 = vpop.permute.xlu0 %1149
      %1151 = vrot.lane.b32.xlu0 %v177, 92
      %v1152 = vpop.permute.xlu0 %1151
      %1153 = vrot.lane.b32.xlu0 %v178, 92
      %v1154 = vpop.permute.xlu0 %1153
      %vm1155 = vcmask 752640
      %v1156 = vsel %vm1155, %v1148, %v1150
      %v1157 = vsel %vm1155, %v1150, %v1152
      %v1158 = vsel %vm1155, %v1152, %v1154
      %v1163 = vsel %vm200, %v1146, 0
      %1165 = vmatprep.subr.mxu0 %v1157
      %1166 = vmatpush1.msra.mxu0 %v1156
      %1167 = vmatprep.subr.mxu0 0.0
      %1168 = vmatpush1.msra.mxu0 0.0
      %1169 = vmatprep.subr.mxu0 0.0
      %1170 = vmatpush1.msra.mxu0 0.0
      %1171 = vmatprep.subr.mxu0 0.0
      %1172 = vmatpush1.msra.mxu0 0.0
      %1173 = vmatprep.subr.mxu0 0.0
      %1174 = vmatpush1.msra.mxu0 0.0
      %1175 = vmatprep.subr.mxu0 0.0
      %1176 = vmatpush1.msra.mxu0 0.0
      %1177 = vmatprep.subr.mxu0 0.0
      %1178 = vmatpush1.msra.mxu0 0.0
      %1179 = vmatprep.subr.mxu0 0.0
      %1180 = vmatpush1.msra.mxu0 0.0
      %1181 = vmatprep.subr.mxu0 0.0
      %1182 = vmatpush1.msra.mxu0 0.0
      %1183 = vmatprep.subr.mxu0 0.0
      %1184 = vmatpush1.msra.mxu0 0.0
      %1185 = vmatprep.subr.mxu0 0.0
      %1186 = vmatpush1.msra.mxu0 0.0
      %1187 = vmatprep.subr.mxu0 0.0
      %1188 = vmatpush1.msra.mxu0 0.0
      %1189 = vmatprep.subr.mxu0 0.0
      %1190 = vmatpush1.msra.mxu0 0.0
      %1191 = vmatprep.subr.mxu0 0.0
      %1192 = vmatpush1.msra.mxu0 0.0
      %1193 = vmatprep.subr.mxu0 0.0
      %1194 = vmatpush1.msra.mxu0 0.0
      %1195 = vmatprep.subr.mxu0 0.0
      %1196 = vmatpush1.msra.mxu0 0.0
      %1197 = vmatprep.subr.mxu0 0.0
      %1198 = vmatpush1.msra.mxu0 0.0
      %1199 = vmatprep.subr.mxu0 0.0
      %1200 = vmatpush1.msra.mxu0 0.0
      %1201 = vmatprep.subr.mxu0 0.0
      %1202 = vmatpush1.msra.mxu0 0.0
      %1203 = vmatprep.subr.mxu0 0.0
      %1204 = vmatpush1.msra.mxu0 0.0
      %1205 = vmatprep.subr.mxu0 0.0
      %1206 = vmatpush1.msra.mxu0 0.0
      %1207 = vmatprep.subr.mxu0 0.0
      %1208 = vmatpush1.msra.mxu0 0.0
      %1209 = vmatprep.subr.mxu0 0.0
      %1210 = vmatpush1.msra.mxu0 0.0
      %1211 = vmatprep.subr.mxu0 0.0
      %1212 = vmatpush1.msra.mxu0 0.0
      %1213 = vmatprep.subr.mxu0 0.0
      %1214 = vmatpush1.msra.mxu0 0.0
      %1215 = vmatprep.subr.mxu0 0.0
      %1216 = vmatpush1.msra.mxu0 0.0
      %1217 = vmatprep.subr.mxu0 0.0
      %1218 = vmatpush1.msra.mxu0 0.0
      %1219 = vmatprep.subr.mxu0 0.0
      %1220 = vmatpush1.msra.mxu0 0.0
      %1221 = vmatprep.subr.mxu0 0.0
      %1222 = vmatpush1.msra.mxu0 0.0
      %1223 = vmatprep.subr.mxu0 0.0
      %1224 = vmatpush1.msra.mxu0 0.0
      %1225 = vmatprep.subr.mxu0 0.0
      %1226 = vmatpush1.msra.mxu0 0.0
      %1227 = vmatprep.subr.mxu0 0.0
      %1228 = vmatpush1.msra.mxu0 0.0
      %1229 = vmatprep.mubr.f32.mxu0 0.0
      %1230 = vmatmul.mubr.f32.gmra.mrb[0].mxu0 %v1163
      %v1231 = vpop.f32.mrb[0].mxu0
      %v1232 = vadd.f32 0.0, %v1231
      %v1233 = vpop.f32.mrb[0].mxu0
      %v1234 = vadd.f32 0.0, %v1233
      %1235 = vdwg.mxu0
      %1236 = vmatprep.subr.mxu0 0.0
      %1237 = vmatpush1.msra.mxu0 %v1158
      %1238 = vmatprep.subr.mxu0 0.0
      %1239 = vmatpush1.msra.mxu0 0.0
      %1240 = vmatprep.subr.mxu0 0.0
      %1241 = vmatpush1.msra.mxu0 0.0
      %1242 = vmatprep.subr.mxu0 0.0
      %1243 = vmatpush1.msra.mxu0 0.0
      %1244 = vmatprep.subr.mxu0 0.0
      %1245 = vmatpush1.msra.mxu0 0.0
      %1246 = vmatprep.subr.mxu0 0.0
      %1247 = vmatpush1.msra.mxu0 0.0
      %1248 = vmatprep.subr.mxu0 0.0
      %1249 = vmatpush1.msra.mxu0 0.0
      %1250 = vmatprep.subr.mxu0 0.0
      %1251 = vmatpush1.msra.mxu0 0.0
      %1252 = vmatprep.subr.mxu0 0.0
      %1253 = vmatpush1.msra.mxu0 0.0
      %1254 = vmatprep.subr.mxu0 0.0
      %1255 = vmatpush1.msra.mxu0 0.0
      %1256 = vmatprep.subr.mxu0 0.0
      %1257 = vmatpush1.msra.mxu0 0.0
      %1258 = vmatprep.subr.mxu0 0.0
      %1259 = vmatpush1.msra.mxu0 0.0
      %1260 = vmatprep.subr.mxu0 0.0
      %1261 = vmatpush1.msra.mxu0 0.0
      %1262 = vmatprep.subr.mxu0 0.0
      %1263 = vmatpush1.msra.mxu0 0.0
      %1264 = vmatprep.subr.mxu0 0.0
      %1265 = vmatpush1.msra.mxu0 0.0
      %1266 = vmatprep.subr.mxu0 0.0
      %1267 = vmatpush1.msra.mxu0 0.0
      %1268 = vmatprep.subr.mxu0 0.0
      %1269 = vmatpush1.msra.mxu0 0.0
      %1270 = vmatprep.subr.mxu0 0.0
      %1271 = vmatpush1.msra.mxu0 0.0
      %1272 = vmatprep.subr.mxu0 0.0
      %1273 = vmatpush1.msra.mxu0 0.0
      %1274 = vmatprep.subr.mxu0 0.0
      %1275 = vmatpush1.msra.mxu0 0.0
      %1276 = vmatprep.subr.mxu0 0.0
      %1277 = vmatpush1.msra.mxu0 0.0
      %1278 = vmatprep.subr.mxu0 0.0
      %1279 = vmatpush1.msra.mxu0 0.0
      %1280 = vmatprep.subr.mxu0 0.0
      %1281 = vmatpush1.msra.mxu0 0.0
      %1282 = vmatprep.subr.mxu0 0.0
      %1283 = vmatpush1.msra.mxu0 0.0
      %1284 = vmatprep.subr.mxu0 0.0
      %1285 = vmatpush1.msra.mxu0 0.0
      %1286 = vmatprep.subr.mxu0 0.0
      %1287 = vmatpush1.msra.mxu0 0.0
      %1288 = vmatprep.subr.mxu0 0.0
      %1289 = vmatpush1.msra.mxu0 0.0
      %1290 = vmatprep.subr.mxu0 0.0
      %1291 = vmatpush1.msra.mxu0 0.0
      %1292 = vmatprep.subr.mxu0 0.0
      %1293 = vmatpush1.msra.mxu0 0.0
      %1294 = vmatprep.subr.mxu0 0.0
      %1295 = vmatpush1.msra.mxu0 0.0
      %1296 = vmatprep.subr.mxu0 0.0
      %1297 = vmatpush1.msra.mxu0 0.0
      %1298 = vmatprep.subr.mxu0 0.0
      %1299 = vmatpush1.msra.mxu0 0.0
      %1300 = vmatprep.mubr.f32.mxu0 0.0
      %1301 = vmatmul.mubr.f32.gmra.mrb[0].mxu0 %v1163
      %v1302 = vpop.f32.mrb[0].mxu0
      %v1303 = vadd.f32 0.0, %v1302
      %v1304 = vpop.f32.mrb[0].mxu0
      %1305 = vdwg.mxu0
      %v1306 = vadd.f32 %v1142, %v1232
      %v1307 = vadd.f32 %v1143, %v1234
      %v1308 = vadd.f32 %v1144, %v1303
      %s1309 = scalar_lea.vmem %s1, 56
      %v1310 = vld [vmem:[%s1309] sm:$0xff]
      %1311 = vrot.lane.b32.xlu0 %v175, 91
      %v1312 = vpop.permute.xlu0 %1311
      %1313 = vrot.lane.b32.xlu0 %v176, 91
      %v1314 = vpop.permute.xlu0 %1313
      %1315 = vrot.lane.b32.xlu0 %v177, 91
      %v1316 = vpop.permute.xlu0 %1315
      %1317 = vrot.lane.b32.xlu0 %v178, 91
      %v1318 = vpop.permute.xlu0 %1317
      %vm1319 = vcmask 744448
      %v1320 = vsel %vm1319, %v1312, %v1314
      %v1321 = vsel %vm1319, %v1314, %v1316
      %v1322 = vsel %vm1319, %v1316, %v1318
      %v1327 = vsel %vm200, %v1310, 0
      %1329 = vmatprep.subr.mxu0 %v1321
      %1330 = vmatpush1.msra.mxu0 %v1320
      %1331 = vmatprep.subr.mxu0 0.0
      %1332 = vmatpush1.msra.mxu0 0.0
      %1333 = vmatprep.subr.mxu0 0.0
      %1334 = vmatpush1.msra.mxu0 0.0
      %1335 = vmatprep.subr.mxu0 0.0
      %1336 = vmatpush1.msra.mxu0 0.0
      %1337 = vmatprep.subr.mxu0 0.0
      %1338 = vmatpush1.msra.mxu0 0.0
      %1339 = vmatprep.subr.mxu0 0.0
      %1340 = vmatpush1.msra.mxu0 0.0
      %1341 = vmatprep.subr.mxu0 0.0
      %1342 = vmatpush1.msra.mxu0 0.0
      %1343 = vmatprep.subr.mxu0 0.0
      %1344 = vmatpush1.msra.mxu0 0.0
      %1345 = vmatprep.subr.mxu0 0.0
      %1346 = vmatpush1.msra.mxu0 0.0
      %1347 = vmatprep.subr.mxu0 0.0
      %1348 = vmatpush1.msra.mxu0 0.0
      %1349 = vmatprep.subr.mxu0 0.0
      %1350 = vmatpush1.msra.mxu0 0.0
      %1351 = vmatprep.subr.mxu0 0.0
      %1352 = vmatpush1.msra.mxu0 0.0
      %1353 = vmatprep.subr.mxu0 0.0
      %1354 = vmatpush1.msra.mxu0 0.0
      %1355 = vmatprep.subr.mxu0 0.0
      %1356 = vmatpush1.msra.mxu0 0.0
      %1357 = vmatprep.subr.mxu0 0.0
      %1358 = vmatpush1.msra.mxu0 0.0
      %1359 = vmatprep.subr.mxu0 0.0
      %1360 = vmatpush1.msra.mxu0 0.0
      %1361 = vmatprep.subr.mxu0 0.0
      %1362 = vmatpush1.msra.mxu0 0.0
      %1363 = vmatprep.subr.mxu0 0.0
      %1364 = vmatpush1.msra.mxu0 0.0
      %1365 = vmatprep.subr.mxu0 0.0
      %1366 = vmatpush1.msra.mxu0 0.0
      %1367 = vmatprep.subr.mxu0 0.0
      %1368 = vmatpush1.msra.mxu0 0.0
      %1369 = vmatprep.subr.mxu0 0.0
      %1370 = vmatpush1.msra.mxu0 0.0
      %1371 = vmatprep.subr.mxu0 0.0
      %1372 = vmatpush1.msra.mxu0 0.0
      %1373 = vmatprep.subr.mxu0 0.0
      %1374 = vmatpush1.msra.mxu0 0.0
      %1375 = vmatprep.subr.mxu0 0.0
      %1376 = vmatpush1.msra.mxu0 0.0
      %1377 = vmatprep.subr.mxu0 0.0
      %1378 = vmatpush1.msra.mxu0 0.0
      %1379 = vmatprep.subr.mxu0 0.0
      %1380 = vmatpush1.msra.mxu0 0.0
      %1381 = vmatprep.subr.mxu0 0.0
      %1382 = vmatpush1.msra.mxu0 0.0
      %1383 = vmatprep.subr.mxu0 0.0
      %1384 = vmatpush1.msra.mxu0 0.0
      %1385 = vmatprep.subr.mxu0 0.0
      %1386 = vmatpush1.msra.mxu0 0.0
      %1387 = vmatprep.subr.mxu0 0.0
      %1388 = vmatpush1.msra.mxu0 0.0
      %1389 = vmatprep.subr.mxu0 0.0
      %1390 = vmatpush1.msra.mxu0 0.0
      %1391 = vmatprep.subr.mxu0 0.0
      %1392 = vmatpush1.msra.mxu0 0.0
      %1393 = vmatprep.mubr.f32.mxu0 0.0
      %1394 = vmatmul.mubr.f32.gmra.mrb[0].mxu0 %v1327
      %v1395 = vpop.f32.mrb[0].mxu0
      %v1396 = vadd.f32 0.0, %v1395
      %v1397 = vpop.f32.mrb[0].mxu0
      %v1398 = vadd.f32 0.0, %v1397
      %1399 = vdwg.mxu0
      %1400 = vmatprep.subr.mxu0 0.0
      %1401 = vmatpush1.msra.mxu0 %v1322
      %1402 = vmatprep.subr.mxu0 0.0
      %1403 = vmatpush1.msra.mxu0 0.0
      %1404 = vmatprep.subr.mxu0 0.0
      %1405 = vmatpush1.msra.mxu0 0.0
      %1406 = vmatprep.subr.mxu0 0.0
      %1407 = vmatpush1.msra.mxu0 0.0
      %1408 = vmatprep.subr.mxu0 0.0
      %1409 = vmatpush1.msra.mxu0 0.0
      %1410 = vmatprep.subr.mxu0 0.0
      %1411 = vmatpush1.msra.mxu0 0.0
      %1412 = vmatprep.subr.mxu0 0.0
      %1413 = vmatpush1.msra.mxu0 0.0
      %1414 = vmatprep.subr.mxu0 0.0
      %1415 = vmatpush1.msra.mxu0 0.0
      %1416 = vmatprep.subr.mxu0 0.0
      %1417 = vmatpush1.msra.mxu0 0.0
      %1418 = vmatprep.subr.mxu0 0.0
      %1419 = vmatpush1.msra.mxu0 0.0
      %1420 = vmatprep.subr.mxu0 0.0
      %1421 = vmatpush1.msra.mxu0 0.0
      %1422 = vmatprep.subr.mxu0 0.0
      %1423 = vmatpush1.msra.mxu0 0.0
      %1424 = vmatprep.subr.mxu0 0.0
      %1425 = vmatpush1.msra.mxu0 0.0
      %1426 = vmatprep.subr.mxu0 0.0
      %1427 = vmatpush1.msra.mxu0 0.0
      %1428 = vmatprep.subr.mxu0 0.0
      %1429 = vmatpush1.msra.mxu0 0.0
      %1430 = vmatprep.subr.mxu0 0.0
      %1431 = vmatpush1.msra.mxu0 0.0
      %1432 = vmatprep.subr.mxu0 0.0
      %1433 = vmatpush1.msra.mxu0 0.0
      %1434 = vmatprep.subr.mxu0 0.0
      %1435 = vmatpush1.msra.mxu0 0.0
      %1436 = vmatprep.subr.mxu0 0.0
      %1437 = vmatpush1.msra.mxu0 0.0
      %1438 = vmatprep.subr.mxu0 0.0
      %1439 = vmatpush1.msra.mxu0 0.0
      %1440 = vmatprep.subr.mxu0 0.0
      %1441 = vmatpush1.msra.mxu0 0.0
      %1442 = vmatprep.subr.mxu0 0.0
      %1443 = vmatpush1.msra.mxu0 0.0
      %1444 = vmatprep.subr.mxu0 0.0
      %1445 = vmatpush1.msra.mxu0 0.0
      %1446 = vmatprep.subr.mxu0 0.0
      %1447 = vmatpush1.msra.mxu0 0.0
      %1448 = vmatprep.subr.mxu0 0.0
      %1449 = vmatpush1.msra.mxu0 0.0
      %1450 = vmatprep.subr.mxu0 0.0
      %1451 = vmatpush1.msra.mxu0 0.0
      %1452 = vmatprep.subr.mxu0 0.0
      %1453 = vmatpush1.msra.mxu0 0.0
      %1454 = vmatprep.subr.mxu0 0.0
      %1455 = vmatpush1.msra.mxu0 0.0
      %1456 = vmatprep.subr.mxu0 0.0
      %1457 = vmatpush1.msra.mxu0 0.0
      %1458 = vmatprep.subr.mxu0 0.0
      %1459 = vmatpush1.msra.mxu0 0.0
      %1460 = vmatprep.subr.mxu0 0.0
      %1461 = vmatpush1.msra.mxu0 0.0
      %1462 = vmatprep.subr.mxu0 0.0
      %1463 = vmatpush1.msra.mxu0 0.0
      %1464 = vmatprep.mubr.f32.mxu0 0.0
      %1465 = vmatmul.mubr.f32.gmra.mrb[0].mxu0 %v1327
      %v1466 = vpop.f32.mrb[0].mxu0
      %v1467 = vadd.f32 0.0, %v1466
      %v1468 = vpop.f32.mrb[0].mxu0
      %1469 = vdwg.mxu0
      %v1470 = vadd.f32 %v1306, %v1396
      %v1471 = vadd.f32 %v1307, %v1398
      %v1472 = vadd.f32 %v1308, %v1467
      %s1473 = scalar_lea.vmem %s1, 64
      %v1474 = vld [vmem:[%s1473] sm:$0xff]
      %1475 = vrot.lane.b32.xlu0 %v175, 90
      %v1476 = vpop.permute.xlu0 %1475
      %1477 = vrot.lane.b32.xlu0 %v176, 90
      %v1478 = vpop.permute.xlu0 %1477
      %1479 = vrot.lane.b32.xlu0 %v177, 90
      %v1480 = vpop.permute.xlu0 %1479
      %1481 = vrot.lane.b32.xlu0 %v178, 90
      %v1482 = vpop.permute.xlu0 %1481
      %vm1483 = vcmask 736256
      %v1484 = vsel %vm1483, %v1476, %v1478
      %v1485 = vsel %vm1483, %v1478, %v1480
      %v1486 = vsel %vm1483, %v1480, %v1482
      %v1491 = vsel %vm200, %v1474, 0
      %1493 = vmatprep.subr.mxu0 %v1485
      %1494 = vmatpush1.msra.mxu0 %v1484
      %1495 = vmatprep.subr.mxu0 0.0
      %1496 = vmatpush1.msra.mxu0 0.0
      %1497 = vmatprep.subr.mxu0 0.0
      %1498 = vmatpush1.msra.mxu0 0.0
      %1499 = vmatprep.subr.mxu0 0.0
      %1500 = vmatpush1.msra.mxu0 0.0
      %1501 = vmatprep.subr.mxu0 0.0
      %1502 = vmatpush1.msra.mxu0 0.0
      %1503 = vmatprep.subr.mxu0 0.0
      %1504 = vmatpush1.msra.mxu0 0.0
      %1505 = vmatprep.subr.mxu0 0.0
      %1506 = vmatpush1.msra.mxu0 0.0
      %1507 = vmatprep.subr.mxu0 0.0
      %1508 = vmatpush1.msra.mxu0 0.0
      %1509 = vmatprep.subr.mxu0 0.0
      %1510 = vmatpush1.msra.mxu0 0.0
      %1511 = vmatprep.subr.mxu0 0.0
      %1512 = vmatpush1.msra.mxu0 0.0
      %1513 = vmatprep.subr.mxu0 0.0
      %1514 = vmatpush1.msra.mxu0 0.0
      %1515 = vmatprep.subr.mxu0 0.0
      %1516 = vmatpush1.msra.mxu0 0.0
      %1517 = vmatprep.subr.mxu0 0.0
      %1518 = vmatpush1.msra.mxu0 0.0
      %1519 = vmatprep.subr.mxu0 0.0
      %1520 = vmatpush1.msra.mxu0 0.0
      %1521 = vmatprep.subr.mxu0 0.0
      %1522 = vmatpush1.msra.mxu0 0.0
      %1523 = vmatprep.subr.mxu0 0.0
      %1524 = vmatpush1.msra.mxu0 0.0
      %1525 = vmatprep.subr.mxu0 0.0
      %1526 = vmatpush1.msra.mxu0 0.0
      %1527 = vmatprep.subr.mxu0 0.0
      %1528 = vmatpush1.msra.mxu0 0.0
      %1529 = vmatprep.subr.mxu0 0.0
      %1530 = vmatpush1.msra.mxu0 0.0
      %1531 = vmatprep.subr.mxu0 0.0
      %1532 = vmatpush1.msra.mxu0 0.0
      %1533 = vmatprep.subr.mxu0 0.0
      %1534 = vmatpush1.msra.mxu0 0.0
      %1535 = vmatprep.subr.mxu0 0.0
      %1536 = vmatpush1.msra.mxu0 0.0
      %1537 = vmatprep.subr.mxu0 0.0
      %1538 = vmatpush1.msra.mxu0 0.0
      %1539 = vmatprep.subr.mxu0 0.0
      %1540 = vmatpush1.msra.mxu0 0.0
      %1541 = vmatprep.subr.mxu0 0.0
      %1542 = vmatpush1.msra.mxu0 0.0
      %1543 = vmatprep.subr.mxu0 0.0
      %1544 = vmatpush1.msra.mxu0 0.0
      %1545 = vmatprep.subr.mxu0 0.0
      %1546 = vmatpush1.msra.mxu0 0.0
      %1547 = vmatprep.subr.mxu0 0.0
      %1548 = vmatpush1.msra.mxu0 0.0
      %1549 = vmatprep.subr.mxu0 0.0
      %1550 = vmatpush1.msra.mxu0 0.0
      %1551 = vmatprep.subr.mxu0 0.0
      %1552 = vmatpush1.msra.mxu0 0.0
      %1553 = vmatprep.subr.mxu0 0.0
      %1554 = vmatpush1.msra.mxu0 0.0
      %1555 = vmatprep.subr.mxu0 0.0
      %1556 = vmatpush1.msra.mxu0 0.0
      %1557 = vmatprep.mubr.f32.mxu0 0.0
      %1558 = vmatmul.mubr.f32.gmra.mrb[0].mxu0 %v1491
      %v1559 = vpop.f32.mrb[0].mxu0
      %v1560 = vadd.f32 0.0, %v1559
      %v1561 = vpop.f32.mrb[0].mxu0
      %v1562 = vadd.f32 0.0, %v1561
      %1563 = vdwg.mxu0
      %1564 = vmatprep.subr.mxu0 0.0
      %1565 = vmatpush1.msra.mxu0 %v1486
      %1566 = vmatprep.subr.mxu0 0.0
      %1567 = vmatpush1.msra.mxu0 0.0
      %1568 = vmatprep.subr.mxu0 0.0
      %1569 = vmatpush1.msra.mxu0 0.0
      %1570 = vmatprep.subr.mxu0 0.0
      %1571 = vmatpush1.msra.mxu0 0.0
      %1572 = vmatprep.subr.mxu0 0.0
      %1573 = vmatpush1.msra.mxu0 0.0
      %1574 = vmatprep.subr.mxu0 0.0
      %1575 = vmatpush1.msra.mxu0 0.0
      %1576 = vmatprep.subr.mxu0 0.0
      %1577 = vmatpush1.msra.mxu0 0.0
      %1578 = vmatprep.subr.mxu0 0.0
      %1579 = vmatpush1.msra.mxu0 0.0
      %1580 = vmatprep.subr.mxu0 0.0
      %1581 = vmatpush1.msra.mxu0 0.0
      %1582 = vmatprep.subr.mxu0 0.0
      %1583 = vmatpush1.msra.mxu0 0.0
      %1584 = vmatprep.subr.mxu0 0.0
      %1585 = vmatpush1.msra.mxu0 0.0
      %1586 = vmatprep.subr.mxu0 0.0
      %1587 = vmatpush1.msra.mxu0 0.0
      %1588 = vmatprep.subr.mxu0 0.0
      %1589 = vmatpush1.msra.mxu0 0.0
      %1590 = vmatprep.subr.mxu0 0.0
      %1591 = vmatpush1.msra.mxu0 0.0
      %1592 = vmatprep.subr.mxu0 0.0
      %1593 = vmatpush1.msra.mxu0 0.0
      %1594 = vmatprep.subr.mxu0 0.0
      %1595 = vmatpush1.msra.mxu0 0.0
      %1596 = vmatprep.subr.mxu0 0.0
      %1597 = vmatpush1.msra.mxu0 0.0
      %1598 = vmatprep.subr.mxu0 0.0
      %1599 = vmatpush1.msra.mxu0 0.0
      %1600 = vmatprep.subr.mxu0 0.0
      %1601 = vmatpush1.msra.mxu0 0.0
      %1602 = vmatprep.subr.mxu0 0.0
      %1603 = vmatpush1.msra.mxu0 0.0
      %1604 = vmatprep.subr.mxu0 0.0
      %1605 = vmatpush1.msra.mxu0 0.0
      %1606 = vmatprep.subr.mxu0 0.0
      %1607 = vmatpush1.msra.mxu0 0.0
      %1608 = vmatprep.subr.mxu0 0.0
      %1609 = vmatpush1.msra.mxu0 0.0
      %1610 = vmatprep.subr.mxu0 0.0
      %1611 = vmatpush1.msra.mxu0 0.0
      %1612 = vmatprep.subr.mxu0 0.0
      %1613 = vmatpush1.msra.mxu0 0.0
      %1614 = vmatprep.subr.mxu0 0.0
      %1615 = vmatpush1.msra.mxu0 0.0
      %1616 = vmatprep.subr.mxu0 0.0
      %1617 = vmatpush1.msra.mxu0 0.0
      %1618 = vmatprep.subr.mxu0 0.0
      %1619 = vmatpush1.msra.mxu0 0.0
      %1620 = vmatprep.subr.mxu0 0.0
      %1621 = vmatpush1.msra.mxu0 0.0
      %1622 = vmatprep.subr.mxu0 0.0
      %1623 = vmatpush1.msra.mxu0 0.0
      %1624 = vmatprep.subr.mxu0 0.0
      %1625 = vmatpush1.msra.mxu0 0.0
      %1626 = vmatprep.subr.mxu0 0.0
      %1627 = vmatpush1.msra.mxu0 0.0
      %1628 = vmatprep.mubr.f32.mxu0 0.0
      %1629 = vmatmul.mubr.f32.gmra.mrb[0].mxu0 %v1491
      %v1630 = vpop.f32.mrb[0].mxu0
      %v1631 = vadd.f32 0.0, %v1630
      %v1632 = vpop.f32.mrb[0].mxu0
      %1633 = vdwg.mxu0
      %v1634 = vadd.f32 %v1470, %v1560
      %v1635 = vadd.f32 %v1471, %v1562
      %v1636 = vadd.f32 %v1472, %v1631
      %v1637 = vld [vmem:[%s2] sm:$0xff]
      %1639 = vset.pattern.permute.xlu0 0
      %1640 = vperm.xlu0 %1639, %v1637
      %v1641 = vpop.permute.xlu0 %1640
      %v1643 = vadd.f32 %v1634, %v1641
      %v1644 = vadd.f32 %v1635, %v1641
      %v1645 = vadd.f32 %v1636, %v1641
      %v1646 = vxor.u32 %v1643, 2147483648
      %v1647 = vxor.u32 %v1644, 2147483648
      %v1648 = vxor.u32 %v1645, 2147483648
      %v1649 = vmul.f32 %v1646, 1.442695
      %v1650 = vpow.pop %v1649
      %v1651 = vmul.f32 %v1647, 1.442695
      %v1652 = vpow.pop %v1651
      %v1653 = vmul.f32 %v1648, 1.442695
      %v1654 = vpow.pop %v1653
      %v1655 = vadd.f32 %v1650, 1.0
      %v1656 = vadd.f32 %v1652, 1.0
      %v1657 = vadd.f32 %v1654, 1.0
      %v1658 = vrcp.pop %v1655
      %v1659 = vmul.f32 1.0, %v1658
      %v1660 = vrcp.pop %v1656
      %v1661 = vmul.f32 1.0, %v1660
      %v1662 = vrcp.pop %v1657
      %v1663 = vmul.f32 1.0, %v1662
      %v1664 = vmul.f32 %v1643, %v1659
      %v1665 = vmul.f32 %v1644, %v1661
      %v1666 = vmul.f32 %v1645, %v1663
      %1667 = vst [vmem:[%s170] sm:$0xff] %v1664
      %1668 = vst [vmem:[%s170 + $0x8] sm:$0xff] %v1665
      %1669 = vst [vmem:[%s170 + $0x10] sm:$0xff] %v1666
      %p1670 = scmp.lt.s32.totalorder %s14, 1
      %s1671 = scalar_select %p1670, %s14, 1
      %s1672 = smul.addr %s1671, 3
      %s1673 = smul.addr %s1672, 8
      %s1674 = scalar_lea.vmem %s3, %s1673
      // Predicated region
      $region33: #{repconv_forward.1} parent=31 // pred_check
        %p1675 = pneg %p100
      $region34: #{repconv_forward.1} parent=31 // pred_check_branch
        %1677 = sbr.rel (%p1675) target = $region36
      $region35: #{repconv_forward.1} parent=31 // pred_region
        _
      $region36: #{repconv_forward.1} parent=31 // pred_fallthru
        _
    $region32: #{repconv_forward.1} parent=5 // pred_fallthru
      _
    %p1678 = scmp.le.s32.totalorder 2, %s9
    // Predicated region
    $region37: #{repconv_forward.1} parent=5 // pred_check
      %p1679 = pneg %p1678
    $region38: #{repconv_forward.1} parent=5 // pred_check_branch
      %1681 = sbr.rel (%p1679) target = $region40
    $region39: #{repconv_forward.1} parent=5 // pred_region
      %s1682 = ssub.s32 %s9, 2
      // Predicated region
      $region41: #{repconv_forward.1} parent=39 // pred_check
        %p1683 = pneg %p106
      $region42: #{repconv_forward.1} parent=39 // pred_check_branch
        %1685 = sbr.rel (%p1683) target = $region44
      $region43: #{repconv_forward.1} parent=39 // pred_region
        %p1686 = scmp.lt.s32.totalorder %s15, 1
        %s1687 = scalar_select %p1686, %s15, 1
        %s1688 = smul.addr %s1687, 3
        %s1689 = smul.addr %s1688, 8
        %s1690 = scalar_lea.vmem %s3, %s1689
      $region44: #{repconv_forward.1} parent=39 // pred_fallthru
        _
    $region40: #{repconv_forward.1} parent=5 // pred_fallthru
      _
  $region6: #{repconv_forward.1} parent=0 // loop_footer
    %s13 = sadd.s32 1, %s9
  $region7: #{repconv_forward.1} parent=0 // loop_footer_branch
    %8 = sbr.rel target = $region3
  $region8: #{repconv_forward.1} parent=0 // loop_exit
    _

</llo_original>
